<compile_context>
chip_gen: v5e
topology: v5e:2x2
jax: 0.10.0
libtpu: 0.0.40
codegen_flags: <defaults>
</compile_context>

<pallas_src>
import functools
import math

import jax
import jax.numpy as jnp
from jax.experimental import pallas as pl
from jax.experimental.pallas import tpu as pltpu


# ----------------------------------------------------------------------------
# Generation-aware sizing helpers
# ----------------------------------------------------------------------------
@functools.lru_cache(maxsize=None)
def _tpu_vmem_capacity_bytes():
    try:
        return int(pltpu.get_tpu_info().vmem_capacity_bytes)
    except Exception:
        return 64 * 1024 * 1024  # conservative fallback (v7x per-core VMEM)


def _tile_caps():
    vmem = _tpu_vmem_capacity_bytes()
    if vmem >= 96 * 1024 * 1024:   # v5e / v6e (128 MiB physical VMEM)
        return {"block_m": 512, "block_q": 256, "block_kv": 256}
    # v7x-class parts (64 MiB per TensorCore): smaller flash tiles.
    return {"block_m": 512, "block_q": 128, "block_kv": 128}


def _padded_bytes(shape, dtype):
    """VMEM footprint of a buffer, with (8, 128) sublane/lane padding."""
    dims = list(shape)
    if len(dims) >= 1:
        dims[-1] = max(pl.cdiv(int(dims[-1]), 128) * 128, 128)
    if len(dims) >= 2:
        dims[-2] = max(pl.cdiv(int(dims[-2]), 8) * 8, 8)
    n = 1
    for d in dims:
        n *= int(d)
    return n * jnp.dtype(dtype).itemsize


def _vmem_estimate(entries):
    """entries: iterable of (shape, dtype, n_buffers)."""
    total = 0
    for shape, dtype, n_buffers in entries:
        total += n_buffers * _padded_bytes(shape, dtype)
    return int(total * 1.5) + (4 << 20)


def _clamp_vmem_limit(estimate):
    cap = _tpu_vmem_capacity_bytes()
    # Never below the usual 32 MiB default scoped limit; never above physical VMEM.
    return int(min(max(estimate, 32 << 20), cap))


# ----------------------------------------------------------------------------
# Kernel 1: row-tiled dense (Linear) layer  y = x @ W + b
# ----------------------------------------------------------------------------
def _linear_kernel(x_ref, w_ref, b_ref, o_ref):
    x = x_ref[...].astype(w_ref.dtype)          # MXU operand dtype == weight dtype
    y = jnp.dot(x, w_ref[...], preferred_element_type=jnp.float32)
    o_ref[...] = (y + b_ref[...]).astype(o_ref.dtype)


def linear(x, w, b, *, block_m=None, out_dtype=None):
    """x: (M, Din), w: (Din, Dout) in compute dtype, b: (1, Dout) f32 -> (M, Dout)."""
    M, Din = x.shape
    Dout = w.shape[1]
    if out_dtype is None:
        out_dtype = x.dtype
    if block_m is None:
        block_m = _tile_caps()["block_m"]
    tm = M if M <= block_m else block_m

    x_spec = pl.BlockSpec((tm, Din), lambda i: (i, 0))
    # Constant-index (resident) operands: single-buffer them.
    w_spec = pl.BlockSpec((Din, Dout), lambda i: (0, 0), pipeline_mode=pl.Buffered(1))
    b_spec = pl.BlockSpec((1, Dout), lambda i: (0, 0), pipeline_mode=pl.Buffered(1))
    o_spec = pl.BlockSpec((tm, Dout), lambda i: (i, 0))

    vmem_limit = _clamp_vmem_limit(_vmem_estimate([
        ((tm, Din), x.dtype, 2),
        ((Din, Dout), w.dtype, 1),
        ((1, Dout), b.dtype, 1),
        ((tm, Dout), out_dtype, 2),
        ((tm, Din), w.dtype, 1),        # in-kernel cast of x
        ((tm, Dout), jnp.float32, 2),   # f32 accumulator / bias-add intermediates
    ]))

    return pl.pallas_call(
        _linear_kernel,
        out_shape=jax.ShapeDtypeStruct((M, Dout), out_dtype),
        grid=(pl.cdiv(M, tm),),
        in_specs=[x_spec, w_spec, b_spec],
        out_specs=o_spec,
        compiler_params=pltpu.CompilerParams(
            dimension_semantics=("parallel",),
            vmem_limit_bytes=vmem_limit),
    )(x, w, b)


# ----------------------------------------------------------------------------
# Kernel 2: fused Q/K/V projection (one pallas_call, three outputs)
# ----------------------------------------------------------------------------
def _qkv_proj_kernel(xq_ref, xk_ref, xv_ref,
                     wq_ref, wk_ref, wv_ref,
                     bq_ref, bk_ref, bv_ref,
                     oq_ref, ok_ref, ov_ref):
    def proj(x_ref, w_ref, b_ref, o_ref):
        x = x_ref[...].astype(w_ref.dtype)
        y = jnp.dot(x, w_ref[...], preferred_element_type=jnp.float32)
        o_ref[...] = (y + b_ref[...]).astype(o_ref.dtype)

    proj(xq_ref, wq_ref, bq_ref, oq_ref)
    proj(xk_ref, wk_ref, bk_ref, ok_ref)
    proj(xv_ref, wv_ref, bv_ref, ov_ref)


def qkv_projection(xq, xk, xv, wq, wk, wv, bq, bk, bv, *,
                   block_m=None, out_dtype=None):
    """Fused Q/K/V projection.  xq/xk/xv: (M, D) -> three (M, D) outputs."""
    M, D = xq.shape
    if out_dtype is None:
        out_dtype = xq.dtype
    if block_m is None:
        block_m = _tile_caps()["block_m"]
    tm = M if M <= block_m else block_m

    row_spec = pl.BlockSpec((tm, D), lambda i: (i, 0))
    w_spec = pl.BlockSpec((D, D), lambda i: (0, 0), pipeline_mode=pl.Buffered(1))
    b_spec = pl.BlockSpec((1, D), lambda i: (0, 0), pipeline_mode=pl.Buffered(1))
    out_sds = jax.ShapeDtypeStruct((M, D), out_dtype)

    vmem_limit = _clamp_vmem_limit(_vmem_estimate([
        ((tm, D), xq.dtype, 2 * 3),
        ((D, D), wq.dtype, 1 * 3),
        ((1, D), bq.dtype, 1 * 3),
        ((tm, D), out_dtype, 2 * 3),
        ((tm, D), wq.dtype, 3),          # in-kernel casts of x
        ((tm, D), jnp.float32, 3),       # f32 accumulators
    ]))

    return pl.pallas_call(
        _qkv_proj_kernel,
        out_shape=(out_sds, out_sds, out_sds),
        grid=(pl.cdiv(M, tm),),
        in_specs=[row_spec, row_spec, row_spec,
                  w_spec, w_spec, w_spec,
                  b_spec, b_spec, b_spec],
        out_specs=(row_spec, row_spec, row_spec),
        compiler_params=pltpu.CompilerParams(
            dimension_semantics=("parallel",),
            vmem_limit_bytes=vmem_limit),
    )(xq, xk, xv, wq, wk, wv, bq, bk, bv)


# ----------------------------------------------------------------------------
# Kernel 3: KV-streamed online-softmax (flash) attention, head groups per block
# ----------------------------------------------------------------------------
def _flash_attn_kernel(q_ref, k_ref, v_ref, o_ref, m_ref, l_ref, acc_ref,
                       *, kv_len, block_kv, compute_dtype):
    ki = pl.program_id(3)

    @pl.when(ki == 0)
    def _():
        m_ref[...] = jnp.full_like(m_ref, -jnp.inf)
        l_ref[...] = jnp.zeros_like(l_ref)
        acc_ref[...] = jnp.zeros_like(acc_ref)

    # NOTE: 1/sqrt(d_k) is folded into W_q / b_q by the wrapper; no per-step scale.
    q = q_ref[...].astype(compute_dtype)     # (Hg, tq, dk)
    k = k_ref[...].astype(compute_dtype)     # (Hg, tkv, dk)
    v = v_ref[...].astype(compute_dtype)     # (Hg, tkv, dk)

    # (Hg, tq, dk) x (Hg, tkv, dk) -> (Hg, tq, tkv); contracts d_k directly (no k.T).
    s = jnp.einsum("hqd,hkd->hqk", q, k, preferred_element_type=jnp.float32)

    if kv_len % block_kv != 0:
        # Only the final kv block can be ragged; the iota/compare live on a tiny
        # (1, 1, tkv) tensor broadcast inside the select (one pass over s).
        col = ki * block_kv + jax.lax.broadcasted_iota(jnp.int32, (1, 1, block_kv), 2)
        s = jnp.where(col < kv_len, s, -1e30)
        # Zero padded V rows so stale/NaN pad data can never leak into the PV matmul.
        row = ki * block_kv + jax.lax.broadcasted_iota(jnp.int32, (1, block_kv, 1), 1)
        v = jnp.where(row < kv_len, v, 0.0)

    m_prev = m_ref[...]                                   # (Hg, tq, 1)
    m_new = jnp.maximum(m_prev, jnp.max(s, axis=-1, keepdims=True))
    alpha = jnp.exp(m_prev - m_new)
    p = jnp.exp(s - m_new)
    l_ref[...] = alpha * l_ref[...] + jnp.sum(p, axis=-1, keepdims=True)
    acc_ref[...] = alpha * acc_ref[...] + jnp.einsum(
        "hqk,hkd->hqd", p.astype(compute_dtype), v,
        preferred_element_type=jnp.float32)
    m_ref[...] = m_new

    @pl.when(ki == pl.num_programs(3) - 1)
    def _():
        # Exact division (not the approximate EUP reciprocal): runs once per q
        # tile, so the cost is negligible and numerics track PyTorch closely.
        o_ref[...] = (acc_ref[...] / l_ref[...]).astype(o_ref.dtype)


def flash_attention(qh, kh, vh, *, block_q=None, block_kv=None, head_groups=None,
                    compute_dtype=jnp.bfloat16, out_dtype=None):
    """qh/kh/vh: (B, H, S, d_k); scale already folded into q.  Returns (B, H, Sq, d_k)."""
    B, H, Sq, dk = qh.shape
    Skv = kh.shape[2]
    if out_dtype is None:
        out_dtype = qh.dtype

    caps = _tile_caps()
    bq_cap = caps["block_q"] if block_q is None else block_q
    bkv_cap = caps["block_kv"] if block_kv is None else block_kv
    tq = Sq if Sq <= bq_cap else bq_cap
    tkv = Skv if Skv <= bkv_cap else bkv_cap
    n_q = pl.cdiv(Sq, tq)
    n_kv = pl.cdiv(Skv, tkv)

    if head_groups is None:
        # Split heads into groups when there are too few parallel grid steps for
        # the two v7x TensorCores (also shrinks the per-step score tensor).
        head_groups = 1
        while (B * n_q * head_groups < 4 and head_groups < H
               and H % (head_groups * 2) == 0):
            head_groups *= 2
    G = head_groups
    assert H % G == 0, "head_groups must divide num_heads"
    Hg = H // G

    q_spec = pl.BlockSpec((None, Hg, tq, dk), lambda b, g, qi, ki: (b, g, qi, 0))
    kv_spec = pl.BlockSpec((None, Hg, tkv, dk), lambda b, g, qi, ki: (b, g, ki, 0))
    o_spec = pl.BlockSpec((None, Hg, tq, dk), lambda b, g, qi, ki: (b, g, qi, 0))

    vmem_limit = _clamp_vmem_limit(_vmem_estimate([
        ((Hg, tq, dk), qh.dtype, 2),
        ((Hg, tkv, dk), kh.dtype, 2),
        ((Hg, tkv, dk), vh.dtype, 2),
        ((Hg, tq, dk), out_dtype, 2),
        ((Hg, tq, 1), jnp.float32, 2),       # m, l scratch
        ((Hg, tq, dk), jnp.float32, 1),      # acc scratch
        ((Hg, tq, tkv), jnp.float32, 3),     # s / p intermediates
    ]))

    return pl.pallas_call(
        functools.partial(_flash_attn_kernel, kv_len=Skv, block_kv=tkv,
                          compute_dtype=compute_dtype),
        out_shape=jax.ShapeDtypeStruct((B, H, Sq, dk), out_dtype),
        grid=(B, G, n_q, n_kv),
        in_specs=[q_spec, kv_spec, kv_spec],
        out_specs=o_spec,
        scratch_shapes=[
            pltpu.VMEM((Hg, tq, 1), jnp.float32),    # running max  m
            pltpu.VMEM((Hg, tq, 1), jnp.float32),    # running sum  l
            pltpu.VMEM((Hg, tq, dk), jnp.float32),   # output accumulator
        ],
        compiler_params=pltpu.CompilerParams(
            dimension_semantics=("parallel", "parallel", "parallel", "arbitrary"),
            vmem_limit_bytes=vmem_limit),
    )(qh, kh, vh)


# ----------------------------------------------------------------------------
# Module wrapper
# ----------------------------------------------------------------------------
def init_mha_params(key, d_model):
    """Deterministic parameter init mimicking nn.Linear (uniform +/- 1/sqrt(in))."""
    ks = jax.random.split(key, 8)
    bound = 1.0 / math.sqrt(d_model)

    def u(k, shape):
        return jax.random.uniform(k, shape, jnp.float32, -bound, bound)

    return {
        "wq": u(ks[0], (d_model, d_model)), "bq": u(ks[1], (1, d_model)),
        "wk": u(ks[2], (d_model, d_model)), "bk": u(ks[3], (1, d_model)),
        "wv": u(ks[4], (d_model, d_model)), "bv": u(ks[5], (1, d_model)),
        "wo": u(ks[6], (d_model, d_model)), "bo": u(ks[7], (1, d_model)),
    }


def multi_head_attention(q, k, v, params, num_heads, *,
                         compute_dtype=jnp.bfloat16, is_self_attention=None):
    """q, k, v: (B, S, D) -> (B, S, D). Mirrors MultiHeadAttention.forward (mask=None)."""
    B, Sq, D = q.shape
    assert D % num_heads == 0, "d_model must be divisible by num_heads"
    d_k = D // num_heads
    scale = 1.0 / math.sqrt(d_k)
    cdt = compute_dtype

    # Cast weights to the MXU operand dtype once (and fold the 1/sqrt(d_k) scale
    # into the Q projection).  Biases stay f32 (added after f32 accumulation).
    wq = (params["wq"] * scale).astype(cdt)
    wk = params["wk"].astype(cdt)
    wv = params["wv"].astype(cdt)
    wo = params["wo"].astype(cdt)
    bq = (params["bq"] * scale).astype(jnp.float32)
    bk = params["bk"].astype(jnp.float32)
    bv = params["bv"].astype(jnp.float32)
    bo = params["bo"].astype(jnp.float32)

    if is_self_attention is None:
        is_self_attention = (q is k) and (k is v)

    q2 = q.reshape(-1, D)
    if is_self_attention:
        # Single activation read + one wide lane-dense (M, 3D) matmul.
        w_qkv = jnp.concatenate([wq, wk, wv], axis=1)   # (D, 3D)
        b_qkv = jnp.concatenate([bq, bk, bv], axis=1)   # (1, 3D)
        qkv = linear(q2, w_qkv, b_qkv, out_dtype=cdt)
        qp, kp, vp = qkv[:, :D], qkv[:, D:2 * D], qkv[:, 2 * D:]
        kB, kS = B, Sq
        vB, vS = B, Sq
    elif q.shape == k.shape == v.shape:
        k2, v2 = k.reshape(-1, D), v.reshape(-1, D)
        qp, kp, vp = qkv_projection(q2, k2, v2, wq, wk, wv, bq, bk, bv,
                                    out_dtype=cdt)
        kB, kS = k.shape[0], k.shape[1]
        vB, vS = v.shape[0], v.shape[1]
    else:  # cross-attention with Skv != Sq: separate projections
        k2, v2 = k.reshape(-1, D), v.reshape(-1, D)
        qp = linear(q2, wq, bq, out_dtype=cdt)
        kp = linear(k2, wk, bk, out_dtype=cdt)
        vp = linear(v2, wv, bv, out_dtype=cdt)
        kB, kS = k.shape[0], k.shape[1]
        vB, vS = v.shape[0], v.shape[1]

    def split_heads(x2d, batch, seq):
        # (batch*seq, D) -> (batch, H, seq, d_k)
        return x2d.reshape(batch, seq, num_heads, d_k).transpose(0, 2, 1, 3)

    qh = split_heads(qp, B, Sq)
    kh = split_heads(kp, kB, kS)
    vh = split_heads(vp, vB, vS)

    out = flash_attention(qh, kh, vh, compute_dtype=cdt, out_dtype=cdt)

    # (B, H, Sq, d_k) -> (B*Sq, D) -> output projection (back to input dtype)
    out = out.transpose(0, 2, 1, 3).reshape(B * Sq, D)
    out = linear(out, wo, bo, out_dtype=q.dtype)
    return out.reshape(B, Sq, D)


# ----------------------------------------------------------------------------
# Pure-JAX reference (for a correctness sanity check)
# ----------------------------------------------------------------------------
def multi_head_attention_ref(q, k, v, params, num_heads):
    B, S, D = q.shape
    d_k = D // num_heads

    def lin(x, w, b):
        return x @ w + b

    def split_heads(x):
        return x.reshape(B, S, num_heads, d_k).transpose(0, 2, 1, 3)

    qh = split_heads(lin(q, params["wq"], params["bq"]))
    kh = split_heads(lin(k, params["wk"], params["bk"]))
    vh = split_heads(lin(v, params["wv"], params["bv"]))
    scores = jnp.einsum("bhqd,bhkd->bhqk", qh, kh) / math.sqrt(d_k)
    attn = jax.nn.softmax(scores, axis=-1)
    out = jnp.einsum("bhqk,bhkd->bhqd", attn, vh)
    out = out.transpose(0, 2, 1, 3).reshape(B, S, D)
    return lin(out, params["wo"], params["bo"])


if __name__ == "__main__":
    B, S, d_model, num_heads = 2, 8, 32, 4

    key = jax.random.PRNGKey(0)
    kq, kk, kv_, kp = jax.random.split(key, 4)
    q = jax.random.normal(kq, (B, S, d_model), jnp.float32)
    k = jax.random.normal(kk, (B, S, d_model), jnp.float32)
    v = jax.random.normal(kv_, (B, S, d_model), jnp.float32)
    params = init_mha_params(kp, d_model)

    # General (cross-tensor) path: fused QKV projection kernel.
    mha = jax.jit(functools.partial(multi_head_attention, num_heads=num_heads))
    out = jax.block_until_ready(mha(q, k, v, params))
    ref = multi_head_attention_ref(q, k, v, params, num_heads)
    assert out.shape == (B, S, d_model)
    # bf16 MXU operands (f32 accumulation) -> moderately loose tolerance.
    assert jnp.allclose(out, ref, atol=2e-2, rtol=2e-2), "mismatch vs reference"

    # Self-attention fast path: packed (D, 3D) weight, single activation read.
    mha_self = jax.jit(functools.partial(multi_head_attention, num_heads=num_heads,
                                         is_self_attention=True))
    out_s = jax.block_until_ready(mha_self(q, q, q, params))
    ref_s = multi_head_attention_ref(q, q, q, params, num_heads)
    assert out_s.shape == (B, S, d_model)
    assert jnp.allclose(out_s, ref_s, atol=2e-2, rtol=2e-2), "self-attn mismatch"

    print("KERNEL_OK")
</pallas_src>

<mosaic_0001>
module attributes {stable_mosaic.version = 11 : i64} {
  func.func @_qkv_proj_kernel(%arg0: i32, %arg1: memref<16x32xf32, #tpu.memory_space<vmem>>, %arg2: memref<16x32xf32, #tpu.memory_space<vmem>>, %arg3: memref<16x32xf32, #tpu.memory_space<vmem>>, %arg4: memref<32x32xbf16, #tpu.memory_space<vmem>>, %arg5: memref<32x32xbf16, #tpu.memory_space<vmem>>, %arg6: memref<32x32xbf16, #tpu.memory_space<vmem>>, %arg7: memref<1x32xf32, #tpu.memory_space<vmem>>, %arg8: memref<1x32xf32, #tpu.memory_space<vmem>>, %arg9: memref<1x32xf32, #tpu.memory_space<vmem>>, %arg10: memref<16x32xbf16, #tpu.memory_space<vmem>>, %arg11: memref<16x32xbf16, #tpu.memory_space<vmem>>, %arg12: memref<16x32xbf16, #tpu.memory_space<vmem>>) attributes {dimension_semantics = [#tpu.dimension_semantics<parallel>], iteration_bounds = array<i64: 1>, scalar_prefetch = 0 : i64, scratch_operands = 0 : i64, tpu.core_type = #tpu.core_type<tc>, window_params = [{transform_indices = @transform_0, window_bounds = array<i64: 16, 32>}, {transform_indices = @transform_1, window_bounds = array<i64: 16, 32>}, {transform_indices = @transform_2, window_bounds = array<i64: 16, 32>}, {pipeline_mode = #tpu.pipeline_mode<synchronous>, transform_indices = @transform_3, window_bounds = array<i64: 32, 32>}, {pipeline_mode = #tpu.pipeline_mode<synchronous>, transform_indices = @transform_4, window_bounds = array<i64: 32, 32>}, {pipeline_mode = #tpu.pipeline_mode<synchronous>, transform_indices = @transform_5, window_bounds = array<i64: 32, 32>}, {pipeline_mode = #tpu.pipeline_mode<synchronous>, transform_indices = @transform_6, window_bounds = array<i64: 1, 32>}, {pipeline_mode = #tpu.pipeline_mode<synchronous>, transform_indices = @transform_7, window_bounds = array<i64: 1, 32>}, {pipeline_mode = #tpu.pipeline_mode<synchronous>, transform_indices = @transform_8, window_bounds = array<i64: 1, 32>}, {transform_indices = @transform_9, window_bounds = array<i64: 16, 32>}, {transform_indices = @transform_10, window_bounds = array<i64: 16, 32>}, {transform_indices = @transform_11, window_bounds = array<i64: 16, 32>}]} {
    %c0 = arith.constant 0 : index
    %c0_0 = arith.constant 0 : index
    %0 = vector.load %arg1[%c0, %c0_0] : memref<16x32xf32, #tpu.memory_space<vmem>>, vector<16x32xf32>
    %1 = arith.truncf %0 : vector<16x32xf32> to vector<16x32xbf16>
    %c0_1 = arith.constant 0 : index
    %c0_2 = arith.constant 0 : index
    %2 = vector.load %arg4[%c0_1, %c0_2] : memref<32x32xbf16, #tpu.memory_space<vmem>>, vector<32x32xbf16>
    %cst = arith.constant dense<0.000000e+00> : vector<16x32xf32>
    %3 = tpu.matmul %1, %2, %cst {dimension_numbers = #tpu.dot_dimension_numbers<[1], [0], [0], [1], [0, 0, 1, 1], [], []>} : vector<16x32xbf16>, vector<32x32xbf16>, vector<16x32xf32> -> vector<16x32xf32>
    %c0_3 = arith.constant 0 : index
    %c0_4 = arith.constant 0 : index
    %4 = vector.load %arg7[%c0_3, %c0_4] : memref<1x32xf32, #tpu.memory_space<vmem>>, vector<1x32xf32>
    %5 = vector.broadcast %4 : vector<1x32xf32> to vector<16x32xf32>
    %6 = arith.addf %3, %5 : vector<16x32xf32>
    %7 = arith.truncf %6 : vector<16x32xf32> to vector<16x32xbf16>
    %c0_5 = arith.constant 0 : index
    %c0_6 = arith.constant 0 : index
    %8 = vector.load %arg10[%c0_5, %c0_6] : memref<16x32xbf16, #tpu.memory_space<vmem>>, vector<16x32xbf16>
    tpu.vector_store %arg10[%c0_5, %c0_6], %7 {strides = array<i32>} : memref<16x32xbf16, #tpu.memory_space<vmem>>, vector<16x32xbf16>,
    %c0_7 = arith.constant 0 : index
    %c0_8 = arith.constant 0 : index
    %9 = vector.load %arg2[%c0_7, %c0_8] : memref<16x32xf32, #tpu.memory_space<vmem>>, vector<16x32xf32>
    %10 = arith.truncf %9 : vector<16x32xf32> to vector<16x32xbf16>
    %c0_9 = arith.constant 0 : index
    %c0_10 = arith.constant 0 : index
    %11 = vector.load %arg5[%c0_9, %c0_10] : memref<32x32xbf16, #tpu.memory_space<vmem>>, vector<32x32xbf16>
    %cst_11 = arith.constant dense<0.000000e+00> : vector<16x32xf32>
    %12 = tpu.matmul %10, %11, %cst_11 {dimension_numbers = #tpu.dot_dimension_numbers<[1], [0], [0], [1], [0, 0, 1, 1], [], []>} : vector<16x32xbf16>, vector<32x32xbf16>, vector<16x32xf32> -> vector<16x32xf32>
    %c0_12 = arith.constant 0 : index
    %c0_13 = arith.constant 0 : index
    %13 = vector.load %arg8[%c0_12, %c0_13] : memref<1x32xf32, #tpu.memory_space<vmem>>, vector<1x32xf32>
    %14 = vector.broadcast %13 : vector<1x32xf32> to vector<16x32xf32>
    %15 = arith.addf %12, %14 : vector<16x32xf32>
    %16 = arith.truncf %15 : vector<16x32xf32> to vector<16x32xbf16>
    %c0_14 = arith.constant 0 : index
    %c0_15 = arith.constant 0 : index
    %17 = vector.load %arg11[%c0_14, %c0_15] : memref<16x32xbf16, #tpu.memory_space<vmem>>, vector<16x32xbf16>
    tpu.vector_store %arg11[%c0_14, %c0_15], %16 {strides = array<i32>} : memref<16x32xbf16, #tpu.memory_space<vmem>>, vector<16x32xbf16>,
    %c0_16 = arith.constant 0 : index
    %c0_17 = arith.constant 0 : index
    %18 = vector.load %arg3[%c0_16, %c0_17] : memref<16x32xf32, #tpu.memory_space<vmem>>, vector<16x32xf32>
    %19 = arith.truncf %18 : vector<16x32xf32> to vector<16x32xbf16>
    %c0_18 = arith.constant 0 : index
    %c0_19 = arith.constant 0 : index
    %20 = vector.load %arg6[%c0_18, %c0_19] : memref<32x32xbf16, #tpu.memory_space<vmem>>, vector<32x32xbf16>
    %cst_20 = arith.constant dense<0.000000e+00> : vector<16x32xf32>
    %21 = tpu.matmul %19, %20, %cst_20 {dimension_numbers = #tpu.dot_dimension_numbers<[1], [0], [0], [1], [0, 0, 1, 1], [], []>} : vector<16x32xbf16>, vector<32x32xbf16>, vector<16x32xf32> -> vector<16x32xf32>
    %c0_21 = arith.constant 0 : index
    %c0_22 = arith.constant 0 : index
    %22 = vector.load %arg9[%c0_21, %c0_22] : memref<1x32xf32, #tpu.memory_space<vmem>>, vector<1x32xf32>
    %23 = vector.broadcast %22 : vector<1x32xf32> to vector<16x32xf32>
    %24 = arith.addf %21, %23 : vector<16x32xf32>
    %25 = arith.truncf %24 : vector<16x32xf32> to vector<16x32xbf16>
    %c0_23 = arith.constant 0 : index
    %c0_24 = arith.constant 0 : index
    %26 = vector.load %arg12[%c0_23, %c0_24] : memref<16x32xbf16, #tpu.memory_space<vmem>>, vector<16x32xbf16>
    tpu.vector_store %arg12[%c0_23, %c0_24], %25 {strides = array<i32>} : memref<16x32xbf16, #tpu.memory_space<vmem>>, vector<16x32xbf16>,
    return
  }
  func.func @transform_0(%arg0: i32) -> (i32, i32) {
    %c0_i32 = arith.constant 0 : i32
    %c0_i32_0 = arith.constant 0 : i32
    return %arg0, %c0_i32 : i32, i32
  }
  func.func @transform_1(%arg0: i32) -> (i32, i32) {
    %c0_i32 = arith.constant 0 : i32
    %c0_i32_0 = arith.constant 0 : i32
    return %arg0, %c0_i32 : i32, i32
  }
  func.func @transform_2(%arg0: i32) -> (i32, i32) {
    %c0_i32 = arith.constant 0 : i32
    %c0_i32_0 = arith.constant 0 : i32
    return %arg0, %c0_i32 : i32, i32
  }
  func.func @transform_3(%arg0: i32) -> (i32, i32) {
    %c0_i32 = arith.constant 0 : i32
    %c0_i32_0 = arith.constant 0 : i32
    %c0_i32_1 = arith.constant 0 : i32
    return %c0_i32, %c0_i32_0 : i32, i32
  }
  func.func @transform_4(%arg0: i32) -> (i32, i32) {
    %c0_i32 = arith.constant 0 : i32
    %c0_i32_0 = arith.constant 0 : i32
    %c0_i32_1 = arith.constant 0 : i32
    return %c0_i32, %c0_i32_0 : i32, i32
  }
  func.func @transform_5(%arg0: i32) -> (i32, i32) {
    %c0_i32 = arith.constant 0 : i32
    %c0_i32_0 = arith.constant 0 : i32
    %c0_i32_1 = arith.constant 0 : i32
    return %c0_i32, %c0_i32_0 : i32, i32
  }
  func.func @transform_6(%arg0: i32) -> (i32, i32) {
    %c0_i32 = arith.constant 0 : i32
    %c0_i32_0 = arith.constant 0 : i32
    %c0_i32_1 = arith.constant 0 : i32
    return %c0_i32, %c0_i32_0 : i32, i32
  }
  func.func @transform_7(%arg0: i32) -> (i32, i32) {
    %c0_i32 = arith.constant 0 : i32
    %c0_i32_0 = arith.constant 0 : i32
    %c0_i32_1 = arith.constant 0 : i32
    return %c0_i32, %c0_i32_0 : i32, i32
  }
  func.func @transform_8(%arg0: i32) -> (i32, i32) {
    %c0_i32 = arith.constant 0 : i32
    %c0_i32_0 = arith.constant 0 : i32
    %c0_i32_1 = arith.constant 0 : i32
    return %c0_i32, %c0_i32_0 : i32, i32
  }
  func.func @transform_9(%arg0: i32) -> (i32, i32) {
    %c0_i32 = arith.constant 0 : i32
    %c0_i32_0 = arith.constant 0 : i32
    return %arg0, %c0_i32 : i32, i32
  }
  func.func @transform_10(%arg0: i32) -> (i32, i32) {
    %c0_i32 = arith.constant 0 : i32
    %c0_i32_0 = arith.constant 0 : i32
    return %arg0, %c0_i32 : i32, i32
  }
  func.func @transform_11(%arg0: i32) -> (i32, i32) {
    %c0_i32 = arith.constant 0 : i32
    %c0_i32_0 = arith.constant 0 : i32
    return %arg0, %c0_i32 : i32, i32
  }
}

module attributes {stable_mosaic.version = 11 : i64} {
  func.func @_flash_attn_kernel(%arg0: i32, %arg1: i32, %arg2: i32, %arg3: i32, %arg4: memref<1x2x8x8xbf16, #tpu.memory_space<vmem>>, %arg5: memref<1x2x8x8xbf16, #tpu.memory_space<vmem>>, %arg6: memref<1x2x8x8xbf16, #tpu.memory_space<vmem>>, %arg7: memref<1x2x8x8xbf16, #tpu.memory_space<vmem>>, %arg8: memref<2x8x1xf32, #tpu.memory_space<vmem>>, %arg9: memref<2x8x1xf32, #tpu.memory_space<vmem>>, %arg10: memref<2x8x8xf32, #tpu.memory_space<vmem>>) attributes {dimension_semantics = [#tpu.dimension_semantics<parallel>, #tpu.dimension_semantics<parallel>, #tpu.dimension_semantics<parallel>, #tpu.dimension_semantics<arbitrary>], iteration_bounds = array<i64: 2, 2, 1, 1>, scalar_prefetch = 0 : i64, scratch_operands = 3 : i64, tpu.core_type = #tpu.core_type<tc>, window_params = [{transform_indices = @transform_0, window_bounds = array<i64: 1, 2, 8, 8>}, {transform_indices = @transform_1, window_bounds = array<i64: 1, 2, 8, 8>}, {transform_indices = @transform_2, window_bounds = array<i64: 1, 2, 8, 8>}, {transform_indices = @transform_3, window_bounds = array<i64: 1, 2, 8, 8>}]} {
    %c0_i32 = arith.constant 0 : i32
    %0 = arith.cmpi eq, %arg3, %c0_i32 : i32
    %1 = arith.extui %0 : i1 to i32
    %c0_i32_0 = arith.constant 0 : i32
    %2 = arith.cmpi ne, %1, %c0_i32_0 : i32
    scf.if %2 {
      %cst_35 = arith.constant 0xFF800000 : f32
      %36 = vector.broadcast %cst_35 : f32 to vector<2x8x1xf32>
      %c0_36 = arith.constant 0 : index
      %c0_37 = arith.constant 0 : index
      %c0_38 = arith.constant 0 : index
      %37 = vector.load %arg8[%c0_36, %c0_37, %c0_38] : memref<2x8x1xf32, #tpu.memory_space<vmem>>, vector<2x8x1xf32>
      tpu.vector_store %arg8[%c0_36, %c0_37, %c0_38], %36 {strides = array<i32>} : memref<2x8x1xf32, #tpu.memory_space<vmem>>, vector<2x8x1xf32>,
      %cst_39 = arith.constant 0.000000e+00 : f32
      %38 = vector.broadcast %cst_39 : f32 to vector<2x8x1xf32>
      %c0_40 = arith.constant 0 : index
      %c0_41 = arith.constant 0 : index
      %c0_42 = arith.constant 0 : index
      %39 = vector.load %arg9[%c0_40, %c0_41, %c0_42] : memref<2x8x1xf32, #tpu.memory_space<vmem>>, vector<2x8x1xf32>
      tpu.vector_store %arg9[%c0_40, %c0_41, %c0_42], %38 {strides = array<i32>} : memref<2x8x1xf32, #tpu.memory_space<vmem>>, vector<2x8x1xf32>,
      %cst_43 = arith.constant 0.000000e+00 : f32
      %40 = vector.broadcast %cst_43 : f32 to vector<2x8x8xf32>
      %c0_44 = arith.constant 0 : index
      %c0_45 = arith.constant 0 : index
      %c0_46 = arith.constant 0 : index
      %41 = vector.load %arg10[%c0_44, %c0_45, %c0_46] : memref<2x8x8xf32, #tpu.memory_space<vmem>>, vector<2x8x8xf32>
      tpu.vector_store %arg10[%c0_44, %c0_45, %c0_46], %40 {strides = array<i32>} : memref<2x8x8xf32, #tpu.memory_space<vmem>>, vector<2x8x8xf32>,
    } else {
    }
    %c0 = arith.constant 0 : index
    %c0_1 = arith.constant 0 : index
    %c0_2 = arith.constant 0 : index
    %c0_3 = arith.constant 0 : index
    %3 = vector.load %arg4[%c0, %c0_1, %c0_2, %c0_3] : memref<1x2x8x8xbf16, #tpu.memory_space<vmem>>, vector<1x2x8x8xbf16>
    %4 = vector.shape_cast %3 : vector<1x2x8x8xbf16> to vector<2x8x8xbf16>
    %c0_4 = arith.constant 0 : index
    %c0_5 = arith.constant 0 : index
    %c0_6 = arith.constant 0 : index
    %c0_7 = arith.constant 0 : index
    %5 = vector.load %arg5[%c0_4, %c0_5, %c0_6, %c0_7] : memref<1x2x8x8xbf16, #tpu.memory_space<vmem>>, vector<1x2x8x8xbf16>
    %6 = vector.shape_cast %5 : vector<1x2x8x8xbf16> to vector<2x8x8xbf16>
    %c0_8 = arith.constant 0 : index
    %c0_9 = arith.constant 0 : index
    %c0_10 = arith.constant 0 : index
    %c0_11 = arith.constant 0 : index
    %7 = vector.load %arg6[%c0_8, %c0_9, %c0_10, %c0_11] : memref<1x2x8x8xbf16, #tpu.memory_space<vmem>>, vector<1x2x8x8xbf16>
    %8 = vector.shape_cast %7 : vector<1x2x8x8xbf16> to vector<2x8x8xbf16>
    "tpu.trace_start"() <{level = 10 : i32, message = "hqd,hkd->hqk"}> : () -> ()
    %cst = arith.constant dense<0.000000e+00> : vector<2x8x8xf32>
    %9 = tpu.matmul %4, %6, %cst {dimension_numbers = #tpu.dot_dimension_numbers<[2], [2], [1], [1], [0, 0, 0, 1, 1, 1], [0], [0]>} : vector<2x8x8xbf16>, vector<2x8x8xbf16>, vector<2x8x8xf32> -> vector<2x8x8xf32>
    "tpu.trace_stop"() : () -> ()
    %c0_12 = arith.constant 0 : index
    %c0_13 = arith.constant 0 : index
    %c0_14 = arith.constant 0 : index
    %10 = vector.load %arg8[%c0_12, %c0_13, %c0_14] : memref<2x8x1xf32, #tpu.memory_space<vmem>>, vector<2x8x1xf32>
    %cst_15 = arith.constant dense<0xFF800000> : vector<2x8xf32>
    %11 = vector.multi_reduction <maximumf>, %9, %cst_15 [2] : vector<2x8x8xf32> to vector<2x8xf32>
    %12 = vector.shape_cast %11 : vector<2x8xf32> to vector<2x8x1xf32>
    %13 = arith.maximumf %10, %12 : vector<2x8x1xf32>
    %14 = arith.subf %10, %13 : vector<2x8x1xf32>
    %15 = math.exp %14 : vector<2x8x1xf32>
    %16 = vector.broadcast %13 : vector<2x8x1xf32> to vector<2x8x8xf32>
    %17 = arith.subf %9, %16 : vector<2x8x8xf32>
    %18 = math.exp %17 : vector<2x8x8xf32>
    %c0_16 = arith.constant 0 : index
    %c0_17 = arith.constant 0 : index
    %c0_18 = arith.constant 0 : index
    %19 = vector.load %arg9[%c0_16, %c0_17, %c0_18] : memref<2x8x1xf32, #tpu.memory_space<vmem>>, vector<2x8x1xf32>
    %20 = arith.mulf %15, %19 : vector<2x8x1xf32>
    %cst_19 = arith.constant dense<0.000000e+00> : vector<2x8xf32>
    %21 = vector.multi_reduction <add>, %18, %cst_19 [2] : vector<2x8x8xf32> to vector<2x8xf32>
    %22 = vector.shape_cast %21 : vector<2x8xf32> to vector<2x8x1xf32>
    %23 = arith.addf %20, %22 : vector<2x8x1xf32>
    %c0_20 = arith.constant 0 : index
    %c0_21 = arith.constant 0 : index
    %c0_22 = arith.constant 0 : index
    %24 = vector.load %arg9[%c0_20, %c0_21, %c0_22] : memref<2x8x1xf32, #tpu.memory_space<vmem>>, vector<2x8x1xf32>
    tpu.vector_store %arg9[%c0_20, %c0_21, %c0_22], %23 {strides = array<i32>} : memref<2x8x1xf32, #tpu.memory_space<vmem>>, vector<2x8x1xf32>,
    %c0_23 = arith.constant 0 : index
    %c0_24 = arith.constant 0 : index
    %c0_25 = arith.constant 0 : index
    %25 = vector.load %arg10[%c0_23, %c0_24, %c0_25] : memref<2x8x8xf32, #tpu.memory_space<vmem>>, vector<2x8x8xf32>
    %26 = vector.broadcast %15 : vector<2x8x1xf32> to vector<2x8x8xf32>
    %27 = arith.mulf %26, %25 : vector<2x8x8xf32>
    %28 = arith.truncf %18 : vector<2x8x8xf32> to vector<2x8x8xbf16>
    "tpu.trace_start"() <{level = 10 : i32, message = "hqk,hkd->hqd"}> : () -> ()
    %cst_26 = arith.constant dense<0.000000e+00> : vector<2x8x8xf32>
    %29 = tpu.matmul %28, %8, %cst_26 {dimension_numbers = #tpu.dot_dimension_numbers<[2], [1], [1], [2], [0, 0, 0, 1, 1, 2], [0], [0]>} : vector<2x8x8xbf16>, vector<2x8x8xbf16>, vector<2x8x8xf32> -> vector<2x8x8xf32>
    "tpu.trace_stop"() : () -> ()
    %30 = arith.addf %27, %29 : vector<2x8x8xf32>
    %c0_27 = arith.constant 0 : index
    %c0_28 = arith.constant 0 : index
    %c0_29 = arith.constant 0 : index
    %31 = vector.load %arg10[%c0_27, %c0_28, %c0_29] : memref<2x8x8xf32, #tpu.memory_space<vmem>>, vector<2x8x8xf32>
    tpu.vector_store %arg10[%c0_27, %c0_28, %c0_29], %30 {strides = array<i32>} : memref<2x8x8xf32, #tpu.memory_space<vmem>>, vector<2x8x8xf32>,
    %c0_30 = arith.constant 0 : index
    %c0_31 = arith.constant 0 : index
    %c0_32 = arith.constant 0 : index
    %32 = vector.load %arg8[%c0_30, %c0_31, %c0_32] : memref<2x8x1xf32, #tpu.memory_space<vmem>>, vector<2x8x1xf32>
    tpu.vector_store %arg8[%c0_30, %c0_31, %c0_32], %13 {strides = array<i32>} : memref<2x8x1xf32, #tpu.memory_space<vmem>>, vector<2x8x1xf32>,
    %c0_i32_33 = arith.constant 0 : i32
    %33 = arith.cmpi eq, %arg3, %c0_i32_33 : i32
    %34 = arith.extui %33 : i1 to i32
    %c0_i32_34 = arith.constant 0 : i32
    %35 = arith.cmpi ne, %34, %c0_i32_34 : i32
    scf.if %35 {
      %c0_35 = arith.constant 0 : index
      %c0_36 = arith.constant 0 : index
      %c0_37 = arith.constant 0 : index
      %36 = vector.load %arg10[%c0_35, %c0_36, %c0_37] : memref<2x8x8xf32, #tpu.memory_space<vmem>>, vector<2x8x8xf32>
      %c0_38 = arith.constant 0 : index
      %c0_39 = arith.constant 0 : index
      %c0_40 = arith.constant 0 : index
      %37 = vector.load %arg9[%c0_38, %c0_39, %c0_40] : memref<2x8x1xf32, #tpu.memory_space<vmem>>, vector<2x8x1xf32>
      %38 = vector.broadcast %37 : vector<2x8x1xf32> to vector<2x8x8xf32>
      %39 = arith.divf %36, %38 : vector<2x8x8xf32>
      %40 = arith.truncf %39 : vector<2x8x8xf32> to vector<2x8x8xbf16>
      %c0_41 = arith.constant 0 : index
      %c0_42 = arith.constant 0 : index
      %c0_43 = arith.constant 0 : index
      %c0_44 = arith.constant 0 : index
      %41 = vector.load %arg7[%c0_41, %c0_42, %c0_43, %c0_44] : memref<1x2x8x8xbf16, #tpu.memory_space<vmem>>, vector<1x2x8x8xbf16>
      %42 = vector.shape_cast %41 : vector<1x2x8x8xbf16> to vector<2x8x8xbf16>
      %43 = vector.shape_cast %40 : vector<2x8x8xbf16> to vector<1x2x8x8xbf16>
      tpu.vector_store %arg7[%c0_41, %c0_42, %c0_43, %c0_44], %43 {strides = array<i32>} : memref<1x2x8x8xbf16, #tpu.memory_space<vmem>>, vector<1x2x8x8xbf16>,
    } else {
    }
    return
  }
  func.func @transform_0(%arg0: i32, %arg1: i32, %arg2: i32, %arg3: i32) -> (i32, i32, i32, i32) {
    %c0_i32 = arith.constant 0 : i32
    %c0_i32_0 = arith.constant 0 : i32
    return %arg0, %arg1, %arg2, %c0_i32 : i32, i32, i32, i32
  }
  func.func @transform_1(%arg0: i32, %arg1: i32, %arg2: i32, %arg3: i32) -> (i32, i32, i32, i32) {
    %c0_i32 = arith.constant 0 : i32
    %c0_i32_0 = arith.constant 0 : i32
    return %arg0, %arg1, %arg3, %c0_i32 : i32, i32, i32, i32
  }
  func.func @transform_2(%arg0: i32, %arg1: i32, %arg2: i32, %arg3: i32) -> (i32, i32, i32, i32) {
    %c0_i32 = arith.constant 0 : i32
    %c0_i32_0 = arith.constant 0 : i32
    return %arg0, %arg1, %arg3, %c0_i32 : i32, i32, i32, i32
  }
  func.func @transform_3(%arg0: i32, %arg1: i32, %arg2: i32, %arg3: i32) -> (i32, i32, i32, i32) {
    %c0_i32 = arith.constant 0 : i32
    %c0_i32_0 = arith.constant 0 : i32
    return %arg0, %arg1, %arg2, %c0_i32 : i32, i32, i32, i32
  }
}

module attributes {stable_mosaic.version = 11 : i64} {
  func.func @_linear_kernel(%arg0: i32, %arg1: memref<16x32xbf16, #tpu.memory_space<vmem>>, %arg2: memref<32x32xbf16, #tpu.memory_space<vmem>>, %arg3: memref<1x32xf32, #tpu.memory_space<vmem>>, %arg4: memref<16x32xf32, #tpu.memory_space<vmem>>) attributes {dimension_semantics = [#tpu.dimension_semantics<parallel>], iteration_bounds = array<i64: 1>, scalar_prefetch = 0 : i64, scratch_operands = 0 : i64, tpu.core_type = #tpu.core_type<tc>, window_params = [{transform_indices = @transform_0, window_bounds = array<i64: 16, 32>}, {pipeline_mode = #tpu.pipeline_mode<synchronous>, transform_indices = @transform_1, window_bounds = array<i64: 32, 32>}, {pipeline_mode = #tpu.pipeline_mode<synchronous>, transform_indices = @transform_2, window_bounds = array<i64: 1, 32>}, {transform_indices = @transform_3, window_bounds = array<i64: 16, 32>}]} {
    %c0 = arith.constant 0 : index
    %c0_0 = arith.constant 0 : index
    %0 = vector.load %arg1[%c0, %c0_0] : memref<16x32xbf16, #tpu.memory_space<vmem>>, vector<16x32xbf16>
    %c0_1 = arith.constant 0 : index
    %c0_2 = arith.constant 0 : index
    %1 = vector.load %arg2[%c0_1, %c0_2] : memref<32x32xbf16, #tpu.memory_space<vmem>>, vector<32x32xbf16>
    %cst = arith.constant dense<0.000000e+00> : vector<16x32xf32>
    %2 = tpu.matmul %0, %1, %cst {dimension_numbers = #tpu.dot_dimension_numbers<[1], [0], [0], [1], [0, 0, 1, 1], [], []>} : vector<16x32xbf16>, vector<32x32xbf16>, vector<16x32xf32> -> vector<16x32xf32>
    %c0_3 = arith.constant 0 : index
    %c0_4 = arith.constant 0 : index
    %3 = vector.load %arg3[%c0_3, %c0_4] : memref<1x32xf32, #tpu.memory_space<vmem>>, vector<1x32xf32>
    %4 = vector.broadcast %3 : vector<1x32xf32> to vector<16x32xf32>
    %5 = arith.addf %2, %4 : vector<16x32xf32>
    %c0_5 = arith.constant 0 : index
    %c0_6 = arith.constant 0 : index
    %6 = vector.load %arg4[%c0_5, %c0_6] : memref<16x32xf32, #tpu.memory_space<vmem>>, vector<16x32xf32>
    tpu.vector_store %arg4[%c0_5, %c0_6], %5 {strides = array<i32>} : memref<16x32xf32, #tpu.memory_space<vmem>>, vector<16x32xf32>,
    return
  }
  func.func @transform_0(%arg0: i32) -> (i32, i32) {
    %c0_i32 = arith.constant 0 : i32
    %c0_i32_0 = arith.constant 0 : i32
    return %arg0, %c0_i32 : i32, i32
  }
  func.func @transform_1(%arg0: i32) -> (i32, i32) {
    %c0_i32 = arith.constant 0 : i32
    %c0_i32_0 = arith.constant 0 : i32
    %c0_i32_1 = arith.constant 0 : i32
    return %c0_i32, %c0_i32_0 : i32, i32
  }
  func.func @transform_2(%arg0: i32) -> (i32, i32) {
    %c0_i32 = arith.constant 0 : i32
    %c0_i32_0 = arith.constant 0 : i32
    %c0_i32_1 = arith.constant 0 : i32
    return %c0_i32, %c0_i32_0 : i32, i32
  }
  func.func @transform_3(%arg0: i32) -> (i32, i32) {
    %c0_i32 = arith.constant 0 : i32
    %c0_i32_0 = arith.constant 0 : i32
    return %arg0, %c0_i32 : i32, i32
  }
}

</mosaic_0001>

<llo_original>
// kernel: multi_head_attention.5
$region0: #{multi_head_attention.5}
  #allocation0 [shape = 'u32[]', space=smem, size = 0x4, offset = 0x4, fixed_abs, tag = 'smem constant byte address 0x4 - core index']
  #allocation1 [shape = 'u32[72,128]{1,0:T(1,128)}', space=vmem, size = 0x9000, scoped, tag = 'internal scratch']
  %s0 = inlined_call_operand.vmem [shape: bf16[16,32], index: 0, kind: input, shape index: {}]
  %s1 = inlined_call_operand.vmem [shape: bf16[32,32], index: 1, kind: input, shape index: {}]
  %s2 = inlined_call_operand.vmem [shape: f32[1,32], index: 2, kind: input, shape index: {}]
  %s3 = inlined_call_operand.hbm [shape: f32[16,32], index: 3, kind: output, shape index: {}]
  %s4 = sld [smem:[#allocation0]]
  $region22: #{multi_head_attention.5} parent=0
    _
  %s6 = ssub.s32 1, %s4
  %s7 = scalar_select 0, %s6, %s4
  $region1: #{multi_head_attention.5} parent=0
    #allocation2 [shape = 'u8[8192]{0}', space=vmem, size = 0x2000, scoped, tag = 'output window, operand 0, single buffered']
    #allocation3 [shape = 's32[1]{0}', space=sflag, size = 0x4, scoped, tag = 'scoped memory for multi_head_attention.5']
    %8 = vsyncpa [#allocation3], 0
    // Predicated region
    $region2: #{multi_head_attention.5} parent=1 // pred_check
      _
    $region3: #{multi_head_attention.5} parent=1 // pred_check_branch
      %10 = sbr.rel (0) target = $region5
    $region4: #{multi_head_attention.5} parent=1 // pred_region
      _
    $region5: #{multi_head_attention.5} parent=1 // pred_fallthru
      _
    // Predicated region
    $region6: #{multi_head_attention.5} parent=1 // pred_check
      _
    $region7: #{multi_head_attention.5} parent=1 // pred_check_branch
      %12 = sbr.rel (0) target = $region9
    $region8: #{multi_head_attention.5} parent=1 // pred_region
      _
    $region9: #{multi_head_attention.5} parent=1 // pred_fallthru
      _
    // Predicated region
    $region10: #{multi_head_attention.5} parent=1 // pred_check
      _
    $region11: #{multi_head_attention.5} parent=1 // pred_check_branch
      %14 = sbr.rel (0) target = $region13
    $region12: #{multi_head_attention.5} parent=1 // pred_region
      _
    $region13: #{multi_head_attention.5} parent=1 // pred_fallthru
      _
    %v16 = vld [vmem:[%s0] sm:$0xf]
    %v17 = vld [vmem:[%s0 + $0x4] sm:$0xf]
    %v18 = vld [vmem:[%s1] sm:$0xf]
    %v19 = vld [vmem:[%s1 + $0x4] sm:$0xf]
    %v20 = vld [vmem:[%s1 + $0x8] sm:$0xf]
    %v21 = vld [vmem:[%s1 + $0xc] sm:$0xf]
    %v22 = vld [vmem:[%s2] sm:$0x1]
    %v24 = vperm.slane %v22, 0
    %v28 = vunpack.c.l.b16 %v16
    %v29 = vunpack.c.l.b16 %v17
    %v30 = vpack.c.b16 %v29, %v28
    %v35 = vunpack.c.l.b16 %v18
    %v36 = vunpack.c.l.b16 %v19
    %v37 = vunpack.c.l.b16 %v20
    %v38 = vunpack.c.l.b16 %v21
    %v39 = vpack.c.b16 %v36, %v35
    %v40 = vpack.c.b16 %v38, %v37
    %vm43 = vcmask 261120
    %v45 = vsel %vm43, %v30, 0
    %47 = vmatpush.bf16.msra.mxu0 0
    %48 = vmatpush.bf16.msra.mxu0 0
    %49 = vmatpush.bf16.msra.mxu0 0
    %50 = vmatpush.bf16.msra.mxu0 0
    %51 = vmatpush.bf16.msra.mxu0 0
    %52 = vmatpush.bf16.msra.mxu0 0
    %53 = vmatpush.bf16.msra.mxu0 %v40
    %54 = vmatpush.bf16.msra.mxu0 %v39
    %55 = vmatmul.bf16.gmra.mxu0 %v45
    %v56 = vpop.f32.mrf.mxu0
    %v57 = vadd.f32 %v24, %v56
    %v58 = vpop.f32.mrf.mxu0
    %v59 = vadd.f32 %v24, %v58
    %60 = vdwg.mxu0
    %61 = vst.msk [vmem:[#allocation2] sm:$0xff] %vm43, %v57
    %62 = vst.msk [vmem:[#allocation2 + $0x8] sm:$0xff] %vm43, %v59
    // Predicated region
    $region14: #{multi_head_attention.5} parent=1 // pred_check
      _
    $region15: #{multi_head_attention.5} parent=1 // pred_check_branch
      %64 = sbr.rel (0) target = $region17
    $region16: #{multi_head_attention.5} parent=1 // pred_region
      %66 = vsyncadd [#allocation3], 0
      %s67 = sshll.u32 [#allocation2], 4
      %s68 = int_to_ptr.vmem [resolvable:$true] %s67
      %s69 = sshll.u32 %s3, 4
      %s70 = int_to_ptr.hbm [resolvable:$true] %s69
      %75 = dma.vmem_to_hbm [thread:$0]  %s68, 256, %s70, [#allocation3], 128, 128, 8
    $region17: #{multi_head_attention.5} parent=1 // pred_fallthru
      _
    // Predicated region
    $region18: #{multi_head_attention.5} parent=1 // pred_check
      _
    $region19: #{multi_head_attention.5} parent=1 // pred_check_branch
      %77 = sbr.rel (0) target = $region21
    $region20: #{multi_head_attention.5} parent=1 // pred_region
      %79 = dma.done [#allocation3], 256
    $region21: #{multi_head_attention.5} parent=1 // pred_fallthru
      _
    %80 = vsyncpa [#allocation3], 1

// kernel: multi_head_attention.3
$region0: #{multi_head_attention.3}
  #allocation0 [shape = 'u32[]', space=smem, size = 0x4, offset = 0x4, fixed_abs, tag = 'smem constant byte address 0x4 - core index']
  #allocation1 [shape = 'u32[72,128]{1,0:T(1,128)}', space=vmem, size = 0x9000, scoped, tag = 'internal scratch']
  %s0 = inlined_call_operand.vmem [shape: f32[16,32], index: 0, kind: input, shape index: {}]
  %s1 = inlined_call_operand.vmem [shape: f32[16,32], index: 1, kind: input, shape index: {}]
  %s2 = inlined_call_operand.vmem [shape: f32[16,32], index: 2, kind: input, shape index: {}]
  %s3 = inlined_call_operand.vmem [shape: bf16[32,32], index: 3, kind: input, shape index: {}]
  %s4 = inlined_call_operand.vmem [shape: bf16[32,32], index: 4, kind: input, shape index: {}]
  %s5 = inlined_call_operand.vmem [shape: bf16[32,32], index: 5, kind: input, shape index: {}]
  %s6 = inlined_call_operand.vmem [shape: f32[1,32], index: 6, kind: input, shape index: {}]
  %s7 = inlined_call_operand.vmem [shape: f32[1,32], index: 7, kind: input, shape index: {}]
  %s8 = inlined_call_operand.vmem [shape: f32[1,32], index: 8, kind: input, shape index: {}]
  %s9 = inlined_call_operand.vmem [shape: bf16[16,32], index: 9, kind: output, shape index: {0}]
  %s10 = inlined_call_operand.vmem [shape: bf16[16,32], index: 10, kind: output, shape index: {1}]
  %s11 = inlined_call_operand.vmem [shape: bf16[16,32], index: 11, kind: output, shape index: {2}]
  %12 = xla_tuple %s9, %s10, %s11
  %s13 = sld [smem:[#allocation0]]
  $region62: #{multi_head_attention.3} parent=0
    _
  %s15 = ssub.s32 1, %s13
  %s16 = scalar_select 0, %s15, %s13
  // Predicated region
  $region2: #{multi_head_attention.3} parent=0 // pred_check
    _
  $region3: #{multi_head_attention.3} parent=0 // pred_check_branch
    %18 = sbr.rel (0) target = $region5
  $region4: #{multi_head_attention.3} parent=0 // pred_region
    _
  $region5: #{multi_head_attention.3} parent=0 // pred_fallthru
    _
  // Predicated region
  $region6: #{multi_head_attention.3} parent=0 // pred_check
    _
  $region7: #{multi_head_attention.3} parent=0 // pred_check_branch
    %20 = sbr.rel (0) target = $region9
  $region8: #{multi_head_attention.3} parent=0 // pred_region
    _
  $region9: #{multi_head_attention.3} parent=0 // pred_fallthru
    _
  // Predicated region
  $region10: #{multi_head_attention.3} parent=0 // pred_check
    _
  $region11: #{multi_head_attention.3} parent=0 // pred_check_branch
    %22 = sbr.rel (0) target = $region13
  $region12: #{multi_head_attention.3} parent=0 // pred_region
    _
  $region13: #{multi_head_attention.3} parent=0 // pred_fallthru
    _
  // Predicated region
  $region14: #{multi_head_attention.3} parent=0 // pred_check
    _
  $region15: #{multi_head_attention.3} parent=0 // pred_check_branch
    %24 = sbr.rel (0) target = $region17
  $region16: #{multi_head_attention.3} parent=0 // pred_region
    _
  $region17: #{multi_head_attention.3} parent=0 // pred_fallthru
    _
  // Predicated region
  $region18: #{multi_head_attention.3} parent=0 // pred_check
    _
  $region19: #{multi_head_attention.3} parent=0 // pred_check_branch
    %26 = sbr.rel (0) target = $region21
  $region20: #{multi_head_attention.3} parent=0 // pred_region
    _
  $region21: #{multi_head_attention.3} parent=0 // pred_fallthru
    _
  // Predicated region
  $region22: #{multi_head_attention.3} parent=0 // pred_check
    _
  $region23: #{multi_head_attention.3} parent=0 // pred_check_branch
    %28 = sbr.rel (0) target = $region25
  $region24: #{multi_head_attention.3} parent=0 // pred_region
    _
  $region25: #{multi_head_attention.3} parent=0 // pred_fallthru
    _
  // Predicated region
  $region26: #{multi_head_attention.3} parent=0 // pred_check
    _
  $region27: #{multi_head_attention.3} parent=0 // pred_check_branch
    %30 = sbr.rel (0) target = $region29
  $region28: #{multi_head_attention.3} parent=0 // pred_region
    _
  $region29: #{multi_head_attention.3} parent=0 // pred_fallthru
    _
  // Predicated region
  $region30: #{multi_head_attention.3} parent=0 // pred_check
    _
  $region31: #{multi_head_attention.3} parent=0 // pred_check_branch
    %32 = sbr.rel (0) target = $region33
  $region32: #{multi_head_attention.3} parent=0 // pred_region
    _
  $region33: #{multi_head_attention.3} parent=0 // pred_fallthru
    _
  // Predicated region
  $region34: #{multi_head_attention.3} parent=0 // pred_check
    _
  $region35: #{multi_head_attention.3} parent=0 // pred_check_branch
    %34 = sbr.rel (0) target = $region37
  $region36: #{multi_head_attention.3} parent=0 // pred_region
    _
  $region37: #{multi_head_attention.3} parent=0 // pred_fallthru
    _
  %v36 = vld [vmem:[%s0] sm:$0xff]
  %v37 = vld [vmem:[%s0 + $0x8] sm:$0xff]
  %v38 = vpack.c.bf16 %v37, %v36
  %v39 = vld [vmem:[%s3] sm:$0xf]
  %v40 = vld [vmem:[%s3 + $0x4] sm:$0xf]
  %v41 = vld [vmem:[%s3 + $0x8] sm:$0xf]
  %v42 = vld [vmem:[%s3 + $0xc] sm:$0xf]
  %v43 = vld [vmem:[%s6] sm:$0x1]
  %v45 = vperm.slane %v43, 0
  %v51 = vunpack.c.l.b16 %v39
  %v52 = vunpack.c.l.b16 %v40
  %v53 = vunpack.c.l.b16 %v41
  %v54 = vunpack.c.l.b16 %v42
  %v55 = vpack.c.b16 %v52, %v51
  %v56 = vpack.c.b16 %v54, %v53
  %vm59 = vcmask 261120
  %v61 = vsel %vm59, %v38, 0
  %63 = vmatpush.bf16.msra.mxu0 0
  %64 = vmatpush.bf16.msra.mxu0 0
  %65 = vmatpush.bf16.msra.mxu0 0
  %66 = vmatpush.bf16.msra.mxu0 0
  %67 = vmatpush.bf16.msra.mxu0 0
  %68 = vmatpush.bf16.msra.mxu0 0
  %69 = vmatpush.bf16.msra.mxu0 %v56
  %70 = vmatpush.bf16.msra.mxu0 %v55
  %71 = vmatmul.bf16.gmra.mxu0 %v61
  %v72 = vpop.f32.mrf.mxu0
  %v73 = vadd.f32 %v45, %v72
  %v74 = vpop.f32.mrf.mxu0
  %v75 = vadd.f32 %v45, %v74
  %76 = vdwg.mxu0
  %v77 = vpack.c.bf16 %v73, %v73
  %v78 = vpack.c.bf16 %v75, %v75
  %vm79 = vcmask 257024
  %80 = vst.msk [vmem:[%s9] sm:$0xf] %vm79, %v77
  %81 = vst.msk [vmem:[%s9 + $0x4] sm:$0xf] %vm79, %v78
  %v82 = vld [vmem:[%s1] sm:$0xff]
  %v83 = vld [vmem:[%s1 + $0x8] sm:$0xff]
  %v84 = vpack.c.bf16 %v83, %v82
  %v85 = vld [vmem:[%s4] sm:$0xf]
  %v86 = vld [vmem:[%s4 + $0x4] sm:$0xf]
  %v87 = vld [vmem:[%s4 + $0x8] sm:$0xf]
  %v88 = vld [vmem:[%s4 + $0xc] sm:$0xf]
  %v89 = vld [vmem:[%s7] sm:$0x1]
  %v91 = vperm.slane %v89, 0
  %v97 = vunpack.c.l.b16 %v85
  %v98 = vunpack.c.l.b16 %v86
  %v99 = vunpack.c.l.b16 %v87
  %v100 = vunpack.c.l.b16 %v88
  %v101 = vpack.c.b16 %v98, %v97
  %v102 = vpack.c.b16 %v100, %v99
  %v106 = vsel %vm59, %v84, 0
  %108 = vmatpush.bf16.msra.mxu0 0
  %109 = vmatpush.bf16.msra.mxu0 0
  %110 = vmatpush.bf16.msra.mxu0 0
  %111 = vmatpush.bf16.msra.mxu0 0
  %112 = vmatpush.bf16.msra.mxu0 0
  %113 = vmatpush.bf16.msra.mxu0 0
  %114 = vmatpush.bf16.msra.mxu0 %v102
  %115 = vmatpush.bf16.msra.mxu0 %v101
  %116 = vmatmul.bf16.gmra.mxu0 %v106
  %v117 = vpop.f32.mrf.mxu0
  %v118 = vadd.f32 %v91, %v117
  %v119 = vpop.f32.mrf.mxu0
  %v120 = vadd.f32 %v91, %v119
  %121 = vdwg.mxu0
  %v122 = vpack.c.bf16 %v118, %v118
  %v123 = vpack.c.bf16 %v120, %v120
  %124 = vst.msk [vmem:[%s10] sm:$0xf] %vm79, %v122
  %125 = vst.msk [vmem:[%s10 + $0x4] sm:$0xf] %vm79, %v123
  %v126 = vld [vmem:[%s2] sm:$0xff]
  %v127 = vld [vmem:[%s2 + $0x8] sm:$0xff]
  %v128 = vpack.c.bf16 %v127, %v126
  %v129 = vld [vmem:[%s5] sm:$0xf]
  %v130 = vld [vmem:[%s5 + $0x4] sm:$0xf]
  %v131 = vld [vmem:[%s5 + $0x8] sm:$0xf]
  %v132 = vld [vmem:[%s5 + $0xc] sm:$0xf]
  %v133 = vld [vmem:[%s8] sm:$0x1]
  %v135 = vperm.slane %v133, 0
  %v141 = vunpack.c.l.b16 %v129
  %v142 = vunpack.c.l.b16 %v130
  %v143 = vunpack.c.l.b16 %v131
  %v144 = vunpack.c.l.b16 %v132
  %v145 = vpack.c.b16 %v142, %v141
  %v146 = vpack.c.b16 %v144, %v143
  %v150 = vsel %vm59, %v128, 0
  %152 = vmatpush.bf16.msra.mxu0 0
  %153 = vmatpush.bf16.msra.mxu0 0
  %154 = vmatpush.bf16.msra.mxu0 0
  %155 = vmatpush.bf16.msra.mxu0 0
  %156 = vmatpush.bf16.msra.mxu0 0
  %157 = vmatpush.bf16.msra.mxu0 0
  %158 = vmatpush.bf16.msra.mxu0 %v146
  %159 = vmatpush.bf16.msra.mxu0 %v145
  %160 = vmatmul.bf16.gmra.mxu0 %v150
  %v161 = vpop.f32.mrf.mxu0
  %v162 = vadd.f32 %v135, %v161
  %v163 = vpop.f32.mrf.mxu0
  %v164 = vadd.f32 %v135, %v163
  %165 = vdwg.mxu0
  %v166 = vpack.c.bf16 %v162, %v162
  %v167 = vpack.c.bf16 %v164, %v164
  %168 = vst.msk [vmem:[%s11] sm:$0xf] %vm79, %v166
  %169 = vst.msk [vmem:[%s11 + $0x4] sm:$0xf] %vm79, %v167
  // Predicated region
  $region38: #{multi_head_attention.3} parent=0 // pred_check
    _
  $region39: #{multi_head_attention.3} parent=0 // pred_check_branch
    %171 = sbr.rel (0) target = $region41
  $region40: #{multi_head_attention.3} parent=0 // pred_region
    _
  $region41: #{multi_head_attention.3} parent=0 // pred_fallthru
    _
  // Predicated region
  $region42: #{multi_head_attention.3} parent=0 // pred_check
    _
  $region43: #{multi_head_attention.3} parent=0 // pred_check_branch
    %173 = sbr.rel (0) target = $region45
  $region44: #{multi_head_attention.3} parent=0 // pred_region
    _
  $region45: #{multi_head_attention.3} parent=0 // pred_fallthru
    _
  // Predicated region
  $region46: #{multi_head_attention.3} parent=0 // pred_check
    _
  $region47: #{multi_head_attention.3} parent=0 // pred_check_branch
    %175 = sbr.rel (0) target = $region49
  $region48: #{multi_head_attention.3} parent=0 // pred_region
    _
  $region49: #{multi_head_attention.3} parent=0 // pred_fallthru
    _
  // Predicated region
  $region50: #{multi_head_attention.3} parent=0 // pred_check
    _
  $region51: #{multi_head_attention.3} parent=0 // pred_check_branch
    %177 = sbr.rel (0) target = $region53
  $region52: #{multi_head_attention.3} parent=0 // pred_region
    _
  $region53: #{multi_head_attention.3} parent=0 // pred_fallthru
    _
  // Predicated region
  $region54: #{multi_head_attention.3} parent=0 // pred_check
    _
  $region55: #{multi_head_attention.3} parent=0 // pred_check_branch
    %179 = sbr.rel (0) target = $region57
  $region56: #{multi_head_attention.3} parent=0 // pred_region
    _
  $region57: #{multi_head_attention.3} parent=0 // pred_fallthru
    _
  // Predicated region
  $region58: #{multi_head_attention.3} parent=0 // pred_check
    _
  $region59: #{multi_head_attention.3} parent=0 // pred_check_branch
    %181 = sbr.rel (0) target = $region61
  $region60: #{multi_head_attention.3} parent=0 // pred_region
    _
  $region61: #{multi_head_attention.3} parent=0 // pred_fallthru
    _

// kernel: multi_head_attention.4
$region0: #{multi_head_attention.4}
  #allocation0 [shape = 'u32[]', space=smem, size = 0x4, offset = 0x4, fixed_abs, tag = 'smem constant byte address 0x4 - core index']
  #allocation1 [shape = 'u32[72,128]{1,0:T(1,128)}', space=vmem, size = 0x9000, scoped, tag = 'internal scratch']
  #allocation2 [shape = 'f32[2,8,1]{2,1,0:T(8,128)}', space=vmem, size = 0x2000, scoped, tag = 'scratch operand']
  #allocation3 [shape = 'f32[2,8,1]{2,1,0:T(8,128)}', space=vmem, size = 0x2000, scoped, tag = 'scratch operand']
  #allocation4 [shape = 'f32[2,8,8]{2,1,0:T(8,128)}', space=vmem, size = 0x2000, scoped, tag = 'scratch operand']
  %s0 = inlined_call_operand.vmem [shape: bf16[2,4,8,8], index: 0, kind: input, shape index: {}]
  %s1 = inlined_call_operand.vmem [shape: bf16[2,4,8,8], index: 1, kind: input, shape index: {}]
  %s2 = inlined_call_operand.vmem [shape: bf16[2,4,8,8], index: 2, kind: input, shape index: {}]
  %s3 = inlined_call_operand.vmem [shape: bf16[2,4,8,8], index: 3, kind: output, shape index: {}]
  %s4 = sld [smem:[#allocation0]]
  $region53: #{multi_head_attention.4} parent=0
    _
  %s6 = ssub.s32 1, %s4
  %s7 = scalar_select 0, %s6, %s4
  loop: start=0, step=1, limit=6
  $region2: #{multi_head_attention.4} parent=0 // loop_pre_header
    _
  $region3: #{multi_head_attention.4} parent=0 // loop_header
    %s9 = sphi 0, %s13
    %p10 = scmp.ge.s32.totalorder %s9, 6
    %s16 = sphi 0, %s42
    %s17 = sphi 0, %s38
    %s18 = sphi 0, %s34
    %s19 = sphi 0, %s30
    %s20 = sphi 0, %s16
    %s21 = sphi 0, %s17
    %s22 = sphi 0, %s18
    %s23 = sphi 0, %s19
    %s24 = sphi 0, %s20
    %s25 = sphi 0, %s21
    %s26 = sphi 0, %s22
    %s27 = sphi 0, %s23
    %s49 = sphi 0, %s51
    %s52 = sphi 0, %s49
    %s53 = sphi 0, %s52
    %s69 = sphi 0, %s53
    %s79 = sphi 0, %s81
    %s82 = sphi 0, %s79
    %s83 = sphi 0, %s82
    %s99 = sphi 0, %s83
    %s109 = sphi 0, %s111
    %s112 = sphi 0, %s109
    %s113 = sphi 0, %s112
    %s129 = sphi 0, %s113
    %s139 = sphi 0, %s141
    %s142 = sphi 0, %s139
    %s143 = sphi 0, %s142
    %s159 = sphi 0, %s143
  $region4: #{multi_head_attention.4} parent=0 // loop_header_branch
    %12 = sbr.rel (%p10) target = $region8
  $region5: #{multi_head_attention.4} parent=0 // loop_body
    %s14 = ssub.s32 %s9, 1
    %s15 = ssub.s32 %s9, 2
    %s28 = sadd.s32 1, %s19
    %p29 = scmp.ge.s32.totalorder %s28, 1
    %s30 = scalar_select %p29, 0, %s28
    %s31 = sadd.s32 1, %s18
    %s32 = scalar_select %p29, %s31, %s18
    %p33 = scmp.ge.s32.totalorder %s32, 1
    %s34 = scalar_select %p33, 0, %s32
    %s35 = sadd.s32 1, %s17
    %s36 = scalar_select %p33, %s35, %s17
    %p37 = scmp.ge.s32.totalorder %s36, 2
    %s38 = scalar_select %p37, 0, %s36
    %s39 = sadd.s32 1, %s16
    %s40 = scalar_select %p37, %s39, %s16
    %p41 = scmp.ge.s32.totalorder %s40, 2
    %s42 = scalar_select %p41, 0, %s40
    %s43 = ssub.s32 %s16, %s42
    %s44 = ssub.s32 %s17, %s38
    %s45 = sor.u32 %s43, %s44
    %s46 = ssub.s32 %s18, %s34
    %s47 = sor.u32 %s45, %s46
    %p48 = scmp.eq.s32.totalorder %s47, 0
    %s50 = sadd.s32 %s49, 1
    %s51 = scalar_select %p48, %s49, %s50
    %p54 = pneg %p48
    %p55 = scmp.eq.s32.totalorder %s9, 3
    %p56 = por %p54, %p55
    %p57 = scmp.ne.s32.totalorder %s49, %s52
    %p58 = scmp.eq.s32.totalorder %s9, 0
    %p59 = por %p57, %p58
    %p60 = scmp.ne.s32.totalorder %s49, %s52
    %p61 = scmp.eq.s32.totalorder %s14, 3
    %p62 = por %p60, %p61
    %p63 = scmp.ne.s32.totalorder %s52, %s53
    %p64 = scmp.eq.s32.totalorder %s14, 0
    %p65 = por %p63, %p64
    %p66 = scmp.ne.s32.totalorder %s52, %s53
    %p67 = scmp.eq.s32.totalorder %s15, 3
    %p68 = por %p66, %p67
    %p70 = scmp.ne.s32.totalorder %s53, %s69
    %p71 = scmp.eq.s32.totalorder %s15, 0
    %p72 = por %p70, %p71
    %s73 = ssub.s32 %s16, %s42
    %s74 = ssub.s32 %s17, %s38
    %s75 = sor.u32 %s73, %s74
    %s76 = ssub.s32 %s19, %s30
    %s77 = sor.u32 %s75, %s76
    %p78 = scmp.eq.s32.totalorder %s77, 0
    %s80 = sadd.s32 %s79, 1
    %s81 = scalar_select %p78, %s79, %s80
    %p84 = pneg %p78
    %p85 = scmp.eq.s32.totalorder %s9, 3
    %p86 = por %p84, %p85
    %p87 = scmp.ne.s32.totalorder %s79, %s82
    %p88 = scmp.eq.s32.totalorder %s9, 0
    %p89 = por %p87, %p88
    %p90 = scmp.ne.s32.totalorder %s79, %s82
    %p91 = scmp.eq.s32.totalorder %s14, 3
    %p92 = por %p90, %p91
    %p93 = scmp.ne.s32.totalorder %s82, %s83
    %p94 = scmp.eq.s32.totalorder %s14, 0
    %p95 = por %p93, %p94
    %p96 = scmp.ne.s32.totalorder %s82, %s83
    %p97 = scmp.eq.s32.totalorder %s15, 3
    %p98 = por %p96, %p97
    %p100 = scmp.ne.s32.totalorder %s83, %s99
    %p101 = scmp.eq.s32.totalorder %s15, 0
    %p102 = por %p100, %p101
    %s103 = ssub.s32 %s16, %s42
    %s104 = ssub.s32 %s17, %s38
    %s105 = sor.u32 %s103, %s104
    %s106 = ssub.s32 %s19, %s30
    %s107 = sor.u32 %s105, %s106
    %p108 = scmp.eq.s32.totalorder %s107, 0
    %s110 = sadd.s32 %s109, 1
    %s111 = scalar_select %p108, %s109, %s110
    %p114 = pneg %p108
    %p115 = scmp.eq.s32.totalorder %s9, 3
    %p116 = por %p114, %p115
    %p117 = scmp.ne.s32.totalorder %s109, %s112
    %p118 = scmp.eq.s32.totalorder %s9, 0
    %p119 = por %p117, %p118
    %p120 = scmp.ne.s32.totalorder %s109, %s112
    %p121 = scmp.eq.s32.totalorder %s14, 3
    %p122 = por %p120, %p121
    %p123 = scmp.ne.s32.totalorder %s112, %s113
    %p124 = scmp.eq.s32.totalorder %s14, 0
    %p125 = por %p123, %p124
    %p126 = scmp.ne.s32.totalorder %s112, %s113
    %p127 = scmp.eq.s32.totalorder %s15, 3
    %p128 = por %p126, %p127
    %p130 = scmp.ne.s32.totalorder %s113, %s129
    %p131 = scmp.eq.s32.totalorder %s15, 0
    %p132 = por %p130, %p131
    %s133 = ssub.s32 %s16, %s42
    %s134 = ssub.s32 %s17, %s38
    %s135 = sor.u32 %s133, %s134
    %s136 = ssub.s32 %s18, %s34
    %s137 = sor.u32 %s135, %s136
    %p138 = scmp.eq.s32.totalorder %s137, 0
    %s140 = sadd.s32 %s139, 1
    %s141 = scalar_select %p138, %s139, %s140
    %p144 = pneg %p138
    %p145 = scmp.eq.s32.totalorder %s9, 3
    %p146 = por %p144, %p145
    %p147 = scmp.ne.s32.totalorder %s139, %s142
    %p148 = scmp.eq.s32.totalorder %s9, 0
    %p149 = por %p147, %p148
    %p150 = scmp.ne.s32.totalorder %s139, %s142
    %p151 = scmp.eq.s32.totalorder %s14, 3
    %p152 = por %p150, %p151
    %p153 = scmp.ne.s32.totalorder %s142, %s143
    %p154 = scmp.eq.s32.totalorder %s14, 0
    %p155 = por %p153, %p154
    %p156 = scmp.ne.s32.totalorder %s142, %s143
    %p157 = scmp.eq.s32.totalorder %s15, 3
    %p158 = por %p156, %p157
    %p160 = scmp.ne.s32.totalorder %s143, %s159
    %p161 = scmp.eq.s32.totalorder %s15, 0
    %p162 = por %p160, %p161
    %p163 = scmp.le.s32.totalorder 1, %s9
    %p164 = scmp.lt.s32.totalorder %s9, 5
    %p165 = pnand %p163, %p164
    %p166 = pneg %p165
    // Predicated region
    $region9: #{multi_head_attention.4} parent=5 // pred_check
      _
    $region10: #{multi_head_attention.4} parent=5 // pred_check_branch
      %168 = sbr.rel (%p165) target = $region12
    $region11: #{multi_head_attention.4} parent=5 // pred_region
      %s169 = ssub.s32 %s9, 1
    $region12: #{multi_head_attention.4} parent=5 // pred_fallthru
      _
    %p170 = scmp.lt.s32.totalorder %s9, 4
    // Predicated region
    $region13: #{multi_head_attention.4} parent=5 // pred_check
      %p171 = pneg %p170
    $region14: #{multi_head_attention.4} parent=5 // pred_check_branch
      %173 = sbr.rel (%p171) target = $region16
    $region15: #{multi_head_attention.4} parent=5 // pred_region
      // Predicated region
      $region17: #{multi_head_attention.4} parent=15 // pred_check
        %p174 = pneg %p59
      $region18: #{multi_head_attention.4} parent=15 // pred_check_branch
        %176 = sbr.rel (%p174) target = $region20
      $region19: #{multi_head_attention.4} parent=15 // pred_region
        %s177 = smul.u32 2, %s17
        %p178 = scmp.lt.s32.totalorder %s16, 1
        %s179 = scalar_select %p178, %s16, 1
        %p180 = scmp.lt.s32.totalorder %s177, 3
        %s181 = scalar_select %p180, %s177, 3
        %p182 = scmp.lt.s32.totalorder %s18, 0
        %s183 = scalar_select %p182, %s18, 0
        %s184 = sadd.s32 %s183, %s181
        %s185 = smul.addr %s179, 4
        %s186 = sadd.s32 %s184, %s185
        %s187 = smul.addr %s186, 4
        %s188 = scalar_lea.vmem %s0, %s187
        %s189 = smul.u32 2, %s17
      $region20: #{multi_head_attention.4} parent=15 // pred_fallthru
        _
      // Predicated region
      $region21: #{multi_head_attention.4} parent=15 // pred_check
        %p190 = pneg %p89
      $region22: #{multi_head_attention.4} parent=15 // pred_check_branch
        %192 = sbr.rel (%p190) target = $region24
      $region23: #{multi_head_attention.4} parent=15 // pred_region
        %s193 = smul.u32 2, %s17
        %p194 = scmp.lt.s32.totalorder %s16, 1
        %s195 = scalar_select %p194, %s16, 1
        %p196 = scmp.lt.s32.totalorder %s193, 3
        %s197 = scalar_select %p196, %s193, 3
        %p198 = scmp.lt.s32.totalorder %s19, 0
        %s199 = scalar_select %p198, %s19, 0
        %s200 = sadd.s32 %s199, %s197
        %s201 = smul.addr %s195, 4
        %s202 = sadd.s32 %s200, %s201
        %s203 = smul.addr %s202, 4
        %s204 = scalar_lea.vmem %s1, %s203
        %s205 = smul.u32 2, %s17
      $region24: #{multi_head_attention.4} parent=15 // pred_fallthru
        _
      // Predicated region
      $region25: #{multi_head_attention.4} parent=15 // pred_check
        %p206 = pneg %p119
      $region26: #{multi_head_attention.4} parent=15 // pred_check_branch
        %208 = sbr.rel (%p206) target = $region28
      $region27: #{multi_head_attention.4} parent=15 // pred_region
        %s209 = smul.u32 2, %s17
        %p210 = scmp.lt.s32.totalorder %s16, 1
        %s211 = scalar_select %p210, %s16, 1
        %p212 = scmp.lt.s32.totalorder %s209, 3
        %s213 = scalar_select %p212, %s209, 3
        %p214 = scmp.lt.s32.totalorder %s19, 0
        %s215 = scalar_select %p214, %s19, 0
        %s216 = sadd.s32 %s215, %s213
        %s217 = smul.addr %s211, 4
        %s218 = sadd.s32 %s216, %s217
        %s219 = smul.addr %s218, 4
        %s220 = scalar_lea.vmem %s2, %s219
        %s221 = smul.u32 2, %s17
      $region28: #{multi_head_attention.4} parent=15 // pred_fallthru
        _
    $region16: #{multi_head_attention.4} parent=5 // pred_fallthru
      _
    %p222 = scmp.le.s32.totalorder 1, %s9
    %p223 = scmp.lt.s32.totalorder %s9, 5
    %p224 = pnand %p222, %p223
    %p225 = pneg %p224
    // Predicated region
    $region29: #{multi_head_attention.4} parent=5 // pred_check
      _
    $region30: #{multi_head_attention.4} parent=5 // pred_check_branch
      %227 = sbr.rel (%p224) target = $region32
    $region31: #{multi_head_attention.4} parent=5 // pred_region
      %s228 = ssub.s32 %s9, 1
      %s229 = smul.u32 2, %s21
      %p230 = scmp.lt.s32.totalorder %s20, 1
      %s231 = scalar_select %p230, %s20, 1
      %p232 = scmp.lt.s32.totalorder %s229, 3
      %s233 = scalar_select %p232, %s229, 3
      %p234 = scmp.lt.s32.totalorder %s22, 0
      %s235 = scalar_select %p234, %s22, 0
      %s236 = sadd.s32 %s235, %s233
      %s237 = smul.addr %s231, 4
      %s238 = sadd.s32 %s236, %s237
      %s239 = smul.addr %s238, 4
      %s240 = scalar_lea.vmem %s0, %s239
      %p241 = pneg %p65
      %p242 = pneg %p62
      %s243 = smul.u32 2, %s21
      %p244 = scmp.lt.s32.totalorder %s20, 1
      %s245 = scalar_select %p244, %s20, 1
      %p246 = scmp.lt.s32.totalorder %s243, 3
      %s247 = scalar_select %p246, %s243, 3
      %p248 = scmp.lt.s32.totalorder %s23, 0
      %s249 = scalar_select %p248, %s23, 0
      %s250 = sadd.s32 %s249, %s247
      %s251 = smul.addr %s245, 4
      %s252 = sadd.s32 %s250, %s251
      %s253 = smul.addr %s252, 4
      %s254 = scalar_lea.vmem %s1, %s253
      %p255 = pneg %p95
      %p256 = pneg %p92
      %s257 = smul.u32 2, %s21
      %p258 = scmp.lt.s32.totalorder %s20, 1
      %s259 = scalar_select %p258, %s20, 1
      %p260 = scmp.lt.s32.totalorder %s257, 3
      %s261 = scalar_select %p260, %s257, 3
      %p262 = scmp.lt.s32.totalorder %s23, 0
      %s263 = scalar_select %p262, %s23, 0
      %s264 = sadd.s32 %s263, %s261
      %s265 = smul.addr %s259, 4
      %s266 = sadd.s32 %s264, %s265
      %s267 = smul.addr %s266, 4
      %s268 = scalar_lea.vmem %s2, %s267
      %p269 = pneg %p125
      %p270 = pneg %p122
      %p271 = pneg %p155
      %p272 = pneg %p152
      %s273 = smul.u32 2, %s21
      %p274 = scmp.lt.s32.totalorder %s20, 1
      %s275 = scalar_select %p274, %s20, 1
      %p276 = scmp.lt.s32.totalorder %s273, 3
      %s277 = scalar_select %p276, %s273, 3
      %p278 = scmp.lt.s32.totalorder %s22, 0
      %s279 = scalar_select %p278, %s22, 0
      %s280 = sadd.s32 %s279, %s277
      %s281 = smul.addr %s275, 4
      %s282 = sadd.s32 %s280, %s281
      %s283 = smul.addr %s282, 4
      %s284 = scalar_lea.vmem %s3, %s283
      %s285 = smul.u32 2, %s21
      %p286 = scmp.lt.s32.totalorder %s20, 1
      %s287 = scalar_select %p286, %s20, 1
      %p288 = scmp.lt.s32.totalorder %s285, 3
      %s289 = scalar_select %p288, %s285, 3
      %p290 = scmp.lt.s32.totalorder %s22, 0
      %s291 = scalar_select %p290, %s22, 0
      %s292 = sadd.s32 %s291, %s289
      %s293 = smul.addr %s287, 4
      %s294 = sadd.s32 %s292, %s293
      %s295 = smul.addr %s294, 4
      %s296 = scalar_lea.vmem %s0, %s295
      %s297 = smul.u32 2, %s21
      %s298 = smul.u32 2, %s21
      %p299 = scmp.lt.s32.totalorder %s20, 1
      %s300 = scalar_select %p299, %s20, 1
      %p301 = scmp.lt.s32.totalorder %s298, 3
      %s302 = scalar_select %p301, %s298, 3
      %p303 = scmp.lt.s32.totalorder %s23, 0
      %s304 = scalar_select %p303, %s23, 0
      %s305 = sadd.s32 %s304, %s302
      %s306 = smul.addr %s300, 4
      %s307 = sadd.s32 %s305, %s306
      %s308 = smul.addr %s307, 4
      %s309 = scalar_lea.vmem %s1, %s308
      %s310 = smul.u32 2, %s21
      %s311 = smul.u32 2, %s21
      %p312 = scmp.lt.s32.totalorder %s20, 1
      %s313 = scalar_select %p312, %s20, 1
      %p314 = scmp.lt.s32.totalorder %s311, 3
      %s315 = scalar_select %p314, %s311, 3
      %p316 = scmp.lt.s32.totalorder %s23, 0
      %s317 = scalar_select %p316, %s23, 0
      %s318 = sadd.s32 %s317, %s315
      %s319 = smul.addr %s313, 4
      %s320 = sadd.s32 %s318, %s319
      %s321 = smul.addr %s320, 4
      %s322 = scalar_lea.vmem %s2, %s321
      %s323 = smul.u32 2, %s21
      %s324 = smul.u32 2, %s21
      %p325 = scmp.lt.s32.totalorder %s20, 1
      %s326 = scalar_select %p325, %s20, 1
      %p327 = scmp.lt.s32.totalorder %s324, 3
      %s328 = scalar_select %p327, %s324, 3
      %p329 = scmp.lt.s32.totalorder %s22, 0
      %s330 = scalar_select %p329, %s22, 0
      %s331 = sadd.s32 %s330, %s328
      %s332 = smul.addr %s326, 4
      %s333 = sadd.s32 %s331, %s332
      %s334 = smul.addr %s333, 4
      %s335 = scalar_lea.vmem %s3, %s334
      %s336 = smul.u32 2, %s21
      %p338 = scmp.eq.s32.totalorder %s23, 0
      // Predicated region
      $region33: #{multi_head_attention.4} parent=31 // pred_check
        %p339 = pneg %p338
      $region34: #{multi_head_attention.4} parent=31 // pred_check_branch
        %341 = sbr.rel (%p339) target = $region36
      $region35: #{multi_head_attention.4} parent=31 // pred_region
        %vm342 = vcmask 7168
        %343 = vst.msk [vmem:[#allocation2] sm:$0xff] %vm342, -inf
        %344 = vst.msk [vmem:[#allocation2 + $0x8] sm:$0xff] %vm342, -inf
        %345 = vst.msk [vmem:[#allocation3] sm:$0xff] %vm342, 0.0
        %346 = vst.msk [vmem:[#allocation3 + $0x8] sm:$0xff] %vm342, 0.0
        %vm347 = vcmask 64512
        %348 = vst.msk [vmem:[#allocation4] sm:$0xff] %vm347, 0.0
        %349 = vst.msk [vmem:[#allocation4 + $0x8] sm:$0xff] %vm347, 0.0
      $region36: #{multi_head_attention.4} parent=31 // pred_fallthru
        _
      %v350 = vld [vmem:[%s296] sm:$0xf]
      %v351 = vld [vmem:[%s296 + $0x4] sm:$0xf]
      %v352 = vld [vmem:[%s309] sm:$0xf]
      %v353 = vld [vmem:[%s309 + $0x4] sm:$0xf]
      %v354 = vld [vmem:[%s322] sm:$0xf]
      %v355 = vld [vmem:[%s322 + $0x4] sm:$0xf]
      %vm356 = vcmask 64512
      %v358 = vsel %vm356, %v350, 0
      %v361 = vsel %vm356, %v352, 0
      %363 = vmatpush.bf16.xpose.msra.mxu0 0
      %364 = vmatpush.bf16.xpose.msra.mxu0 0
      %365 = vmatpush.bf16.xpose.msra.mxu0 0
      %366 = vmatpush.bf16.xpose.msra.mxu0 0
      %367 = vmatpush.bf16.xpose.msra.mxu0 0
      %368 = vmatpush.bf16.xpose.msra.mxu0 0
      %369 = vmatpush.bf16.xpose.msra.mxu0 0
      %370 = vmatpush.bf16.xpose.msra.mxu0 %v361
      %371 = vmatmul.bf16.gmra.mxu0 %v358
      %v372 = vpop.f32.mrf.mxu0
      %v373 = vadd.f32 0.0, %v372
      %v374 = vpop.f32.mrf.mxu0
      %375 = vdwg.mxu0
      %v377 = vsel %vm356, %v351, 0
      %v380 = vsel %vm356, %v353, 0
      %382 = vmatpush.bf16.xpose.msra.mxu0 0
      %383 = vmatpush.bf16.xpose.msra.mxu0 0
      %384 = vmatpush.bf16.xpose.msra.mxu0 0
      %385 = vmatpush.bf16.xpose.msra.mxu0 0
      %386 = vmatpush.bf16.xpose.msra.mxu0 0
      %387 = vmatpush.bf16.xpose.msra.mxu0 0
      %388 = vmatpush.bf16.xpose.msra.mxu0 0
      %389 = vmatpush.bf16.xpose.msra.mxu0 %v380
      %390 = vmatmul.bf16.gmra.mxu0 %v377
      %v391 = vpop.f32.mrf.mxu0
      %v392 = vadd.f32 0.0, %v391
      %v393 = vpop.f32.mrf.mxu0
      %394 = vdwg.mxu0
      %v395 = vld [vmem:[#allocation2] sm:$0xff]
      %v396 = vld [vmem:[#allocation2 + $0x8] sm:$0xff]
      %v397 = vsel %vm356, %v373, -inf
      %398 = vmax.xlane.f32.xlu0 %v397
      %v399 = vpop.xlane.xlu0 %398
      %v400 = vsel %vm356, %v392, -inf
      %401 = vmax.xlane.f32.xlu0 %v400
      %v402 = vpop.xlane.xlu0 %401
      %v403 = vmax.f32 %v395, %v399
      %v404 = vmax.f32 %v396, %v402
      %v405 = vsub.f32 %v395, %v403
      %v406 = vsub.f32 %v396, %v404
      %v407 = vmul.f32 %v405, 1.442695
      %v408 = vpow.pop %v407
      %v409 = vmul.f32 %v406, 1.442695
      %v410 = vpow.pop %v409
      %412 = vset.pattern.permute.xlu0 0
      %413 = vperm.xlu0 %412, %v403
      %v414 = vpop.permute.xlu0 %413
      %417 = vset.pattern.permute.xlu0 0
      %418 = vperm.xlu0 %417, %v404
      %v419 = vpop.permute.xlu0 %418
      %v421 = vsub.f32 %v373, %v414
      %v422 = vsub.f32 %v392, %v419
      %v423 = vmul.f32 %v421, 1.442695
      %v424 = vpow.pop %v423
      %v425 = vmul.f32 %v422, 1.442695
      %v426 = vpow.pop %v425
      %v427 = vld [vmem:[#allocation3] sm:$0xff]
      %v428 = vld [vmem:[#allocation3 + $0x8] sm:$0xff]
      %v429 = vmul.f32 %v408, %v427
      %v430 = vmul.f32 %v410, %v428
      %v431 = vsel %vm356, %v424, 0.0
      %432 = vadd.xlane.f32.xlu0 %v431
      %v433 = vpop.xlane.xlu0 %432
      %v434 = vsel %vm356, %v426, 0.0
      %435 = vadd.xlane.f32.xlu0 %v434
      %v436 = vpop.xlane.xlu0 %435
      %v437 = vadd.f32 %v429, %v433
      %v438 = vadd.f32 %v430, %v436
      %vm439 = vcmask 7168
      %440 = vst.msk [vmem:[#allocation3] sm:$0xff] %vm439, %v437
      %441 = vst.msk [vmem:[#allocation3 + $0x8] sm:$0xff] %vm439, %v438
      %v442 = vld [vmem:[#allocation4] sm:$0xff]
      %v443 = vld [vmem:[#allocation4 + $0x8] sm:$0xff]
      %445 = vset.pattern.permute.xlu0 0
      %446 = vperm.xlu0 %445, %v408
      %v447 = vpop.permute.xlu0 %446
      %450 = vset.pattern.permute.xlu0 0
      %451 = vperm.xlu0 %450, %v410
      %v452 = vpop.permute.xlu0 %451
      %v454 = vmul.f32 %v447, %v442
      %v455 = vmul.f32 %v452, %v443
      %v456 = vpack.c.bf16 %v424, %v424
      %v457 = vpack.c.bf16 %v426, %v426
      %v459 = vsel %vm356, %v456, 0
      %vm461 = vcmask 1043456
      %v463 = vsel %vm461, %v354, 0
      %465 = vmatpush.bf16.msra.mxu0 0
      %466 = vmatpush.bf16.msra.mxu0 0
      %467 = vmatpush.bf16.msra.mxu0 0
      %468 = vmatpush.bf16.msra.mxu0 0
      %469 = vmatpush.bf16.msra.mxu0 0
      %470 = vmatpush.bf16.msra.mxu0 0
      %471 = vmatpush.bf16.msra.mxu0 0
      %472 = vmatpush.bf16.msra.mxu0 %v463
      %473 = vmatmul.bf16.gmra.mxu0 %v459
      %v474 = vpop.f32.mrf.mxu0
      %v475 = vadd.f32 0.0, %v474
      %v476 = vpop.f32.mrf.mxu0
      %477 = vdwg.mxu0
      %v479 = vsel %vm356, %v457, 0
      %v482 = vsel %vm461, %v355, 0
      %484 = vmatpush.bf16.msra.mxu0 0
      %485 = vmatpush.bf16.msra.mxu0 0
      %486 = vmatpush.bf16.msra.mxu0 0
      %487 = vmatpush.bf16.msra.mxu0 0
      %488 = vmatpush.bf16.msra.mxu0 0
      %489 = vmatpush.bf16.msra.mxu0 0
      %490 = vmatpush.bf16.msra.mxu0 0
      %491 = vmatpush.bf16.msra.mxu0 %v482
      %492 = vmatmul.bf16.gmra.mxu0 %v479
      %v493 = vpop.f32.mrf.mxu0
      %v494 = vadd.f32 0.0, %v493
      %v495 = vpop.f32.mrf.mxu0
      %496 = vdwg.mxu0
      %v497 = vadd.f32 %v454, %v475
      %v498 = vadd.f32 %v455, %v494
      %499 = vst.msk [vmem:[#allocation4] sm:$0xff] %vm356, %v497
      %500 = vst.msk [vmem:[#allocation4 + $0x8] sm:$0xff] %vm356, %v498
      %501 = vst.msk [vmem:[#allocation2] sm:$0xff] %vm439, %v403
      %502 = vst.msk [vmem:[#allocation2 + $0x8] sm:$0xff] %vm439, %v404
      // Predicated region
      $region37: #{multi_head_attention.4} parent=31 // pred_check
        %p503 = pneg %p338
      $region38: #{multi_head_attention.4} parent=31 // pred_check_branch
        %505 = sbr.rel (%p503) target = $region40
      $region39: #{multi_head_attention.4} parent=31 // pred_region
        %v506 = vld [vmem:[#allocation4] sm:$0xff]
        %v507 = vld [vmem:[#allocation4 + $0x8] sm:$0xff]
        %v508 = vld [vmem:[#allocation3] sm:$0xff]
        %v509 = vld [vmem:[#allocation3 + $0x8] sm:$0xff]
        %511 = vset.pattern.permute.xlu0 0
        %512 = vperm.xlu0 %511, %v508
        %v513 = vpop.permute.xlu0 %512
        %516 = vset.pattern.permute.xlu0 0
        %517 = vperm.xlu0 %516, %v509
        %v518 = vpop.permute.xlu0 %517
        %v520 = vrcp.pop %v513
        %v521 = vmul.f32 %v513, %v520
        %v522 = vsub.f32 1.0, %v521
        %v523 = vmul.f32 %v520, %v522
        %v524 = vadd.f32 %v520, %v523
        %vm525 = vweird.f32 %v513
        %vm526 = vweird.f32 %v520
        %vm527 = vmor %vm525, %vm526
        %v528 = vsel %vm527, %v520, %v524
        %v529 = vand.u32 2147483647, %v513
        %vm530 = vcmp.eq.f32.partialorder %v529, 8.507059e+37
        %v531 = vand.u32 %v513, 2147483648
        %v532 = vor.u32 1.1754944e-38, %v531
        %v533 = vsel %vm530, %v532, %v528
        %v534 = vmul.f32 %v506, %v533
        %v535 = vrcp.pop %v518
        %v536 = vmul.f32 %v518, %v535
        %v537 = vsub.f32 1.0, %v536
        %v538 = vmul.f32 %v535, %v537
        %v539 = vadd.f32 %v535, %v538
        %vm540 = vweird.f32 %v518
        %vm541 = vweird.f32 %v535
        %vm542 = vmor %vm540, %vm541
        %v543 = vsel %vm542, %v535, %v539
        %v544 = vand.u32 2147483647, %v518
        %vm545 = vcmp.eq.f32.partialorder %v544, 8.507059e+37
        %v546 = vand.u32 %v518, 2147483648
        %v547 = vor.u32 1.1754944e-38, %v546
        %v548 = vsel %vm545, %v547, %v543
        %v549 = vmul.f32 %v507, %v548
        %v550 = vpack.c.bf16 %v534, %v534
        %v551 = vpack.c.bf16 %v549, %v549
        %vm552 = vcmask 60416
        %553 = vst.msk [vmem:[%s335] sm:$0xf] %vm552, %v550
        %554 = vst.msk [vmem:[%s335 + $0x4] sm:$0xf] %vm552, %v551
      $region40: #{multi_head_attention.4} parent=31 // pred_fallthru
        _
      %s555 = smul.u32 2, %s21
      %p556 = scmp.lt.s32.totalorder %s20, 1
      %s557 = scalar_select %p556, %s20, 1
      %p558 = scmp.lt.s32.totalorder %s555, 3
      %s559 = scalar_select %p558, %s555, 3
      %p560 = scmp.lt.s32.totalorder %s22, 0
      %s561 = scalar_select %p560, %s22, 0
      %s562 = sadd.s32 %s561, %s559
      %s563 = smul.addr %s557, 4
      %s564 = sadd.s32 %s562, %s563
      %s565 = smul.addr %s564, 4
      %s566 = scalar_lea.vmem %s3, %s565
      // Predicated region
      $region41: #{multi_head_attention.4} parent=31 // pred_check
        %p567 = pneg %p152
      $region42: #{multi_head_attention.4} parent=31 // pred_check_branch
        %569 = sbr.rel (%p567) target = $region44
      $region43: #{multi_head_attention.4} parent=31 // pred_region
        %s570 = smul.u32 2, %s21
      $region44: #{multi_head_attention.4} parent=31 // pred_fallthru
        _
    $region32: #{multi_head_attention.4} parent=5 // pred_fallthru
      _
    %p571 = scmp.le.s32.totalorder 2, %s9
    // Predicated region
    $region45: #{multi_head_attention.4} parent=5 // pred_check
      %p572 = pneg %p571
    $region46: #{multi_head_attention.4} parent=5 // pred_check_branch
      %574 = sbr.rel (%p572) target = $region48
    $region47: #{multi_head_attention.4} parent=5 // pred_region
      %s575 = ssub.s32 %s9, 2
      // Predicated region
      $region49: #{multi_head_attention.4} parent=47 // pred_check
        %p576 = pneg %p158
      $region50: #{multi_head_attention.4} parent=47 // pred_check_branch
        %578 = sbr.rel (%p576) target = $region52
      $region51: #{multi_head_attention.4} parent=47 // pred_region
        %s579 = smul.u32 2, %s25
        %p580 = scmp.lt.s32.totalorder %s24, 1
        %s581 = scalar_select %p580, %s24, 1
        %p582 = scmp.lt.s32.totalorder %s579, 3
        %s583 = scalar_select %p582, %s579, 3
        %p584 = scmp.lt.s32.totalorder %s26, 0
        %s585 = scalar_select %p584, %s26, 0
        %s586 = sadd.s32 %s585, %s583
        %s587 = smul.addr %s581, 4
        %s588 = sadd.s32 %s586, %s587
        %s589 = smul.addr %s588, 4
        %s590 = scalar_lea.vmem %s3, %s589
      $region52: #{multi_head_attention.4} parent=47 // pred_fallthru
        _
    $region48: #{multi_head_attention.4} parent=5 // pred_fallthru
      _
  $region6: #{multi_head_attention.4} parent=0 // loop_footer
    %s13 = sadd.s32 1, %s9
  $region7: #{multi_head_attention.4} parent=0 // loop_footer_branch
    %8 = sbr.rel target = $region3
  $region8: #{multi_head_attention.4} parent=0 // loop_exit
    _

</llo_original>
